<compile_context>
chip_gen: v7x
topology: tpu7x:2x2x1
jax: 0.10.0
libtpu: 0.0.40
codegen_flags: <defaults>
</compile_context>

<pallas_src>
import numpy as np
import jax
import jax.numpy as jnp
from jax.experimental import pallas as pl
from jax.experimental.pallas import tpu as pltpu

_EPS2 = 1e-18          # charbonnier epsilon ** 2  (epsilon = 1e-9, alpha = 0.25)
_SSIM_C1 = 0.01 ** 2
_SSIM_C2 = 0.03 ** 2
_N_SSIM_MAPS = 5       # a, b, a*a, b*b, a*b


def _charbonnier(x):
    # (x^2 + eps^2) ** 0.25 == sqrt(sqrt(x^2 + eps^2))
    return jnp.sqrt(jnp.sqrt(x * x + _EPS2))


# ----------------------------------------------------------------------------
# Host-side (numpy) constant builders.
def _gaussian_1d(window_size=11, sigma=1.5):
    xs = np.arange(window_size, dtype=np.float64)
    g = np.exp(-((xs - window_size // 2) ** 2) / (2.0 * sigma ** 2))
    return g / g.sum()


def _gauss_band_matrix(n, window_size=11, sigma=1.5):
    # M[i, j] = g[j - i + half] for |j - i| <= half, else 0.
    # KH @ X (resp. X @ KW) == 1-D Gaussian conv along rows (cols), zero pad.
    g = _gaussian_1d(window_size, sigma)
    half = window_size // 2
    m = np.zeros((n, n), np.float64)
    for i in range(n):
        for j in range(max(0, i - half), min(n, i + half + 1)):
            m[i, j] = g[j - i + half]
    return m.astype(np.float32)


def _gauss_band_blockdiag(n, blocks, window_size=11, sigma=1.5):
    # block_diag(KH, ..., KH): applies the row blur to a row-stacked (blocks*n, W)
    # operand with a single MXU matmul (no in-kernel transposes/relayouts).
    band = _gauss_band_matrix(n, window_size, sigma)
    m = np.zeros((blocks * n, blocks * n), np.float32)
    for t in range(blocks):
        m[t * n:(t + 1) * n, t * n:(t + 1) * n] = band
    return m


def _shift_matrix(n):
    # (x @ M)[:, j] = x[:, j + 1] for j < n-1, and 0 for the last column.
    m = np.zeros((n, n), np.float32)
    for j in range(n - 1):
        m[j + 1, j] = 1.0
    return m


# ----------------------------------------------------------------------------
# Fused Total_Loss kernel (gridded over B*C image slabs).
def _make_total_loss_kernel(B, C, H, W, Bf, Cf, Hf, Wf, NP,
                            w_pixel, w_smooth, w_dissim, w_au):
    BC = B * C

    def kernel(img_ref, rec_ref, fl_ref, flt_ref, pred_ref, lab_ref,
               kw_ref, kh5_ref, sh_ref, sw_ref, out_ref):
        i = pl.program_id(0)

        # --------- grid step 0: init accumulator + one-shot terms ----------
        @pl.when(i == 0)
        def _():
            # Smooth_Loss: f - {h,v}_translated via shift matmuls (zero fill
            # at the boundary comes from the shift matrix).
            fl = fl_ref[...]                                  # (Bf*Cf*Hf, Wf)
            flt = flt_ref[...]                                # (Bf*Cf*Wf, Hf)
            dh = fl - jnp.dot(fl, sw_ref[...],
                              preferred_element_type=jnp.float32)
            dv = flt - jnp.dot(flt, sh_ref[...],
                               preferred_element_type=jnp.float32)
            smooth_sum = jnp.sum(_charbonnier(dh)) + jnp.sum(_charbonnier(dv))
            smooth_l = smooth_sum / (2.0 * Bf * Hf * Wf)

            # AU_Loss: BCEWithLogits (mean), numerically-stable softplus form.
            x = pred_ref[...]                                 # (1, NP)
            y = lab_ref[...]
            z = jnp.exp(-jnp.abs(x))
            log1p_z = jnp.where(z < 1e-5, z, jnp.log(1.0 + z))
            bce = jnp.maximum(x, 0.0) - x * y + log1p_z
            au_l = jnp.sum(bce) / NP

            out_ref[...] = (jnp.zeros_like(out_ref)
                            + (w_smooth * smooth_l + w_au * au_l))

        # --------- per-slab: fused Pixel_Loss + SSIM (Dissim_Loss) ----------
        a = img_ref[0]                                        # (H, W)
        b = rec_ref[0]                                        # (H, W)

        # Pixel_Loss contribution for this slab (read slabs only once).
        pix_sum = jnp.sum(_charbonnier(b - a))

        # Separable 11x11 Gaussian blur of the 5 maps with 2 MXU matmuls:
        #   T = [a; b; a*a; b*b; a*b] @ KW         (column blur, zero pad)
        #   blurred = blockdiag(KH) @ T            (row blur, zero pad)
        stacked = jnp.concatenate([a, b, a * a, b * b, a * b], axis=0)  # (5H, W)
        t = jnp.dot(stacked, kw_ref[...], preferred_element_type=jnp.float32)
        blurred = jnp.dot(kh5_ref[...], t, preferred_element_type=jnp.float32)

        mu1 = blurred[0 * H:1 * H]
        mu2 = blurred[1 * H:2 * H]
        e11 = blurred[2 * H:3 * H]
        e22 = blurred[3 * H:4 * H]
        e12 = blurred[4 * H:5 * H]

        mu1_sq = mu1 * mu1
        mu2_sq = mu2 * mu2
        mu12 = mu1 * mu2
        sigma1_sq = e11 - mu1_sq
        sigma2_sq = e22 - mu2_sq
        sigma12 = e12 - mu12

        num = (2.0 * mu12 + _SSIM_C1) * (2.0 * sigma12 + _SSIM_C2)
        den = (mu1_sq + mu2_sq + _SSIM_C1) * (sigma1_sq + sigma2_sq + _SSIM_C2)
        ssim_sum = jnp.sum(num / den)   # exact divide kept for numeric parity

        # Weighted per-slab contributions:
        #   pixel: sum_C/3 then mean(B,H,W)   -> / (3*B*H*W)
        #   dissim: -mean(SSIM map)           -> - sum / (B*C*H*W)
        out_ref[...] += (w_pixel * pix_sum / (3.0 * B * H * W)
                         - w_dissim * ssim_sum / (BC * H * W))

    return kernel


# ----------------------------------------------------------------------------
# Glue: F.interpolate(mode='bilinear', align_corners=False) as two matmuls
# with precomputed interpolation matrices (MXU-friendly, no gathers).
def bilinear_resize_nchw(x, out_h, out_w):
    _, _, in_h, in_w = x.shape
    if (in_h, in_w) == (out_h, out_w):
        return x

    def interp_matrix(out_size, in_size):
        m = np.zeros((out_size, in_size), np.float32)
        scale = in_size / out_size
        for o in range(out_size):
            coord = (o + 0.5) * scale - 0.5
            coord = min(max(coord, 0.0), in_size - 1)
            i0 = int(np.floor(coord))
            i1 = min(i0 + 1, in_size - 1)
            frac = coord - i0
            m[o, i0] += 1.0 - frac
            m[o, i1] += frac
        return m

    mh = jnp.asarray(interp_matrix(out_h, in_h))
    mw = jnp.asarray(interp_matrix(out_w, in_w))
    return jnp.einsum('ih,bchw,jw->bcij', mh, x.astype(jnp.float32), mw)


# ----------------------------------------------------------------------------
# Total_Loss.forward
def total_loss(images, reconstructed_images, predictions, labels, flows,
               pixel_weight=1.0, smooth_weight=0.1,
               dissim_weight=0.5, au_weight=1.0):
    B, C, H, W = reconstructed_images.shape
    Bf, Cf, Hf, Wf = flows.shape
    BC = B * C

    # Pixel_Loss resizes images to recon's size.  Any valid Total_Loss call has
    # images.shape == recon.shape (SSIM is elementwise on both), so the resize
    # is an exact identity and the resized tensor is also used for SSIM,
    # matching the PyTorch reference.
    images_resized = bilinear_resize_nchw(images, H, W).astype(jnp.float32)

    img3 = images_resized.reshape(BC, H, W)
    rec3 = reconstructed_images.astype(jnp.float32).reshape(BC, H, W)

    flows = flows.astype(jnp.float32)
    fl2 = flows.reshape(Bf * Cf * Hf, Wf)                        # rows=(b,c,h)
    flt2 = jnp.swapaxes(flows, 2, 3).reshape(Bf * Cf * Wf, Hf)   # rows=(b,c,w)

    NP = int(predictions.size)
    pred2 = predictions.astype(jnp.float32).reshape(1, NP)       # lane-fold (B,7)
    lab2 = labels.astype(jnp.float32).reshape(1, NP)

    kw = jnp.asarray(_gauss_band_matrix(W))                      # (W, W)
    kh5 = jnp.asarray(_gauss_band_blockdiag(H, _N_SSIM_MAPS))    # (5H, 5H)
    sh = jnp.asarray(_shift_matrix(Hf))
    sw = jnp.asarray(_shift_matrix(Wf))

    kernel = _make_total_loss_kernel(
        B, C, H, W, Bf, Cf, Hf, Wf, NP,
        float(pixel_weight), float(smooth_weight),
        float(dissim_weight), float(au_weight))

    # VMEM budget: resident constants + double-buffered (1,H,W) slabs + headroom.
    f32b = 4
    resident_bytes = f32b * (fl2.size + flt2.size + pred2.size + lab2.size
                             + kw.size + kh5.size + sh.size + sw.size + 1)
    pipelined_bytes = f32b * (2 * 2 * H * W)            # img + rec, 2x buffered
    temp_bytes = f32b * (16 * _N_SSIM_MAPS * H * W + 6 * fl2.size)
    vmem_limit = int(min(64 << 20,
                         max(16 << 20,
                             resident_bytes + pipelined_bytes + temp_bytes
                             + (2 << 20))))

    out = pl.pallas_call(
        kernel,
        out_shape=jax.ShapeDtypeStruct((1, 1), jnp.float32),
        grid=(BC,),
        in_specs=[
            pl.BlockSpec((1, H, W), lambda i: (i, 0, 0)),               # img slab
            pl.BlockSpec((1, H, W), lambda i: (i, 0, 0)),               # rec slab
            pl.BlockSpec((Bf * Cf * Hf, Wf), lambda i: (0, 0)),         # flows
            pl.BlockSpec((Bf * Cf * Wf, Hf), lambda i: (0, 0)),         # flows^T
            pl.BlockSpec((1, NP), lambda i: (0, 0)),                    # predictions
            pl.BlockSpec((1, NP), lambda i: (0, 0)),                    # labels
            pl.BlockSpec((W, W), lambda i: (0, 0)),                     # KW
            pl.BlockSpec((_N_SSIM_MAPS * H, _N_SSIM_MAPS * H),
                         lambda i: (0, 0)),                             # blockdiag(KH)
            pl.BlockSpec((Hf, Hf), lambda i: (0, 0)),                   # shift_h
            pl.BlockSpec((Wf, Wf), lambda i: (0, 0)),                   # shift_w
        ],
        out_specs=pl.BlockSpec((1, 1), lambda i: (0, 0)),               # accumulator
        compiler_params=pltpu.CompilerParams(
            dimension_semantics=("arbitrary",),
            vmem_limit_bytes=vmem_limit),
    )(img3, rec3, fl2, flt2, pred2, lab2, kw, kh5, sh, sw)
    return out[0, 0]


if __name__ == "__main__":
    key = jax.random.PRNGKey(0)
    k1, k2, k3, k4, k5 = jax.random.split(key, 5)

    B, C, H, W = 2, 3, 16, 16
    num_class = 7

    images = jax.random.uniform(k1, (B, C, H, W), jnp.float32)
    reconstructed_images = jax.random.uniform(k2, (B, C, H, W), jnp.float32)
    flows = jax.random.normal(k3, (B, 2, H, W), jnp.float32)
    predictions = jax.random.normal(k4, (B, num_class), jnp.float32)
    labels = jax.random.bernoulli(k5, 0.5, (B, num_class)).astype(jnp.float32)

    loss = total_loss(images, reconstructed_images, predictions, labels, flows)
    jax.block_until_ready(loss)
    print("KERNEL_OK")
</pallas_src>

<mosaic_0001>
module attributes {stable_mosaic.version = 11 : i64} {
  func.func @kernel(%arg0: i32, %arg1: memref<1x16x16xf32, #tpu.memory_space<vmem>>, %arg2: memref<1x16x16xf32, #tpu.memory_space<vmem>>, %arg3: memref<64x16xf32, #tpu.memory_space<vmem>>, %arg4: memref<64x16xf32, #tpu.memory_space<vmem>>, %arg5: memref<1x14xf32, #tpu.memory_space<vmem>>, %arg6: memref<1x14xf32, #tpu.memory_space<vmem>>, %arg7: memref<16x16xf32, #tpu.memory_space<vmem>>, %arg8: memref<80x80xf32, #tpu.memory_space<vmem>>, %arg9: memref<16x16xf32, #tpu.memory_space<vmem>>, %arg10: memref<16x16xf32, #tpu.memory_space<vmem>>, %arg11: memref<1x1xf32, #tpu.memory_space<vmem>>) attributes {dimension_semantics = [#tpu.dimension_semantics<arbitrary>], iteration_bounds = array<i64: 6>, scalar_prefetch = 0 : i64, scratch_operands = 0 : i64, tpu.core_type = #tpu.core_type<tc>, window_params = [{transform_indices = @transform_0, window_bounds = array<i64: 1, 16, 16>}, {transform_indices = @transform_1, window_bounds = array<i64: 1, 16, 16>}, {pipeline_mode = #tpu.pipeline_mode<synchronous>, transform_indices = @transform_2, window_bounds = array<i64: 64, 16>}, {pipeline_mode = #tpu.pipeline_mode<synchronous>, transform_indices = @transform_3, window_bounds = array<i64: 64, 16>}, {pipeline_mode = #tpu.pipeline_mode<synchronous>, transform_indices = @transform_4, window_bounds = array<i64: 1, 14>}, {pipeline_mode = #tpu.pipeline_mode<synchronous>, transform_indices = @transform_5, window_bounds = array<i64: 1, 14>}, {pipeline_mode = #tpu.pipeline_mode<synchronous>, transform_indices = @transform_6, window_bounds = array<i64: 16, 16>}, {pipeline_mode = #tpu.pipeline_mode<synchronous>, transform_indices = @transform_7, window_bounds = array<i64: 80, 80>}, {pipeline_mode = #tpu.pipeline_mode<synchronous>, transform_indices = @transform_8, window_bounds = array<i64: 16, 16>}, {pipeline_mode = #tpu.pipeline_mode<synchronous>, transform_indices = @transform_9, window_bounds = array<i64: 16, 16>}, {pipeline_mode = #tpu.pipeline_mode<synchronous>, transform_indices = @transform_10, window_bounds = array<i64: 1, 1>}]} {
    %c0_i32 = arith.constant 0 : i32
    %0 = arith.cmpi eq, %arg0, %c0_i32 : i32
    %1 = arith.extui %0 : i1 to i32
    %c0_i32_0 = arith.constant 0 : i32
    %2 = arith.cmpi ne, %1, %c0_i32_0 : i32
    scf.if %2 {
      %c0_28 = arith.constant 0 : index
      %c0_29 = arith.constant 0 : index
      %66 = vector.load %arg3[%c0_28, %c0_29] : memref<64x16xf32, #tpu.memory_space<vmem>>, vector<64x16xf32>
      %c0_30 = arith.constant 0 : index
      %c0_31 = arith.constant 0 : index
      %67 = vector.load %arg4[%c0_30, %c0_31] : memref<64x16xf32, #tpu.memory_space<vmem>>, vector<64x16xf32>
      %c0_32 = arith.constant 0 : index
      %c0_33 = arith.constant 0 : index
      %68 = vector.load %arg10[%c0_32, %c0_33] : memref<16x16xf32, #tpu.memory_space<vmem>>, vector<16x16xf32>
      %cst_34 = arith.constant dense<0.000000e+00> : vector<64x16xf32>
      %69 = tpu.matmul %66, %68, %cst_34 {dimension_numbers = #tpu.dot_dimension_numbers<[1], [0], [0], [1], [0, 0, 1, 1], [], []>} : vector<64x16xf32>, vector<16x16xf32>, vector<64x16xf32> -> vector<64x16xf32>
      %70 = arith.subf %66, %69 : vector<64x16xf32>
      %c0_35 = arith.constant 0 : index
      %c0_36 = arith.constant 0 : index
      %71 = vector.load %arg9[%c0_35, %c0_36] : memref<16x16xf32, #tpu.memory_space<vmem>>, vector<16x16xf32>
      %cst_37 = arith.constant dense<0.000000e+00> : vector<64x16xf32>
      %72 = tpu.matmul %67, %71, %cst_37 {dimension_numbers = #tpu.dot_dimension_numbers<[1], [0], [0], [1], [0, 0, 1, 1], [], []>} : vector<64x16xf32>, vector<16x16xf32>, vector<64x16xf32> -> vector<64x16xf32>
      %73 = arith.subf %67, %72 : vector<64x16xf32>
      %74 = arith.mulf %70, %70 : vector<64x16xf32>
      %cst_38 = arith.constant 1.000000e-18 : f32
      %75 = vector.broadcast %cst_38 : f32 to vector<64x16xf32>
      %76 = arith.addf %74, %75 : vector<64x16xf32>
      %77 = math.sqrt %76 : vector<64x16xf32>
      %78 = math.sqrt %77 : vector<64x16xf32>
      %79 = vector.shape_cast %78 : vector<64x16xf32> to vector<1x64x16xf32>
      %cst_39 = arith.constant dense<0.000000e+00> : vector<1xf32>
      %80 = vector.multi_reduction <add>, %79, %cst_39 [1, 2] : vector<1x64x16xf32> to vector<1xf32>
      %81 = vector.shape_cast %80 : vector<1xf32> to vector<1x1x1xf32>
      %82 = vector.extract %81[0, 0, 0] : f32 from vector<1x1x1xf32>
      %83 = arith.mulf %73, %73 : vector<64x16xf32>
      %cst_40 = arith.constant 1.000000e-18 : f32
      %84 = vector.broadcast %cst_40 : f32 to vector<64x16xf32>
      %85 = arith.addf %83, %84 : vector<64x16xf32>
      %86 = math.sqrt %85 : vector<64x16xf32>
      %87 = math.sqrt %86 : vector<64x16xf32>
      %88 = vector.shape_cast %87 : vector<64x16xf32> to vector<1x64x16xf32>
      %cst_41 = arith.constant dense<0.000000e+00> : vector<1xf32>
      %89 = vector.multi_reduction <add>, %88, %cst_41 [1, 2] : vector<1x64x16xf32> to vector<1xf32>
      %90 = vector.shape_cast %89 : vector<1xf32> to vector<1x1x1xf32>
      %91 = vector.extract %90[0, 0, 0] : f32 from vector<1x1x1xf32>
      %92 = arith.addf %82, %91 : f32
      %cst_42 = arith.constant 1.024000e+03 : f32
      %93 = arith.divf %92, %cst_42 : f32
      %c0_43 = arith.constant 0 : index
      %c0_44 = arith.constant 0 : index
      %94 = vector.load %arg5[%c0_43, %c0_44] : memref<1x14xf32, #tpu.memory_space<vmem>>, vector<1x14xf32>
      %c0_45 = arith.constant 0 : index
      %c0_46 = arith.constant 0 : index
      %95 = vector.load %arg6[%c0_45, %c0_46] : memref<1x14xf32, #tpu.memory_space<vmem>>, vector<1x14xf32>
      %96 = math.absf %94 : vector<1x14xf32>
      %cst_47 = arith.constant 0.000000e+00 : f32
      %97 = vector.broadcast %cst_47 : f32 to vector<1x14xf32>
      %98 = arith.subf %97, %96 : vector<1x14xf32>
      %99 = math.exp %98 : vector<1x14xf32>
      %cst_48 = arith.constant 9.99999974E-6 : f32
      %100 = vector.broadcast %cst_48 : f32 to vector<1x14xf32>
      %101 = arith.cmpf olt, %99, %100 : vector<1x14xf32>
      %cst_49 = arith.constant 1.000000e+00 : f32
      %102 = vector.broadcast %cst_49 : f32 to vector<1x14xf32>
      %103 = arith.addf %102, %99 : vector<1x14xf32>
      %104 = math.log %103 : vector<1x14xf32>
      %105 = arith.select %101, %99, %104 : vector<1x14xi1>, vector<1x14xf32>
      %cst_50 = arith.constant 0.000000e+00 : f32
      %106 = vector.broadcast %cst_50 : f32 to vector<1x14xf32>
      %107 = arith.maximumf %94, %106 : vector<1x14xf32>
      %108 = arith.mulf %94, %95 : vector<1x14xf32>
      %109 = arith.subf %107, %108 : vector<1x14xf32>
      %110 = arith.addf %109, %105 : vector<1x14xf32>
      %111 = vector.shape_cast %110 : vector<1x14xf32> to vector<1x1x14xf32>
      %cst_51 = arith.constant dense<0.000000e+00> : vector<1xf32>
      %112 = vector.multi_reduction <add>, %111, %cst_51 [1, 2] : vector<1x1x14xf32> to vector<1xf32>
      %113 = vector.shape_cast %112 : vector<1xf32> to vector<1x1x1xf32>
      %114 = vector.extract %113[0, 0, 0] : f32 from vector<1x1x1xf32>
      %cst_52 = arith.constant 1.400000e+01 : f32
      %115 = arith.divf %114, %cst_52 : f32
      %cst_53 = arith.constant 0.000000e+00 : f32
      %116 = vector.broadcast %cst_53 : f32 to vector<1x1xf32>
      %cst_54 = arith.constant 1.000000e-01 : f32
      %117 = arith.mulf %cst_54, %93 : f32
      %cst_55 = arith.constant 1.000000e+00 : f32
      %118 = arith.mulf %cst_55, %115 : f32
      %119 = arith.addf %117, %118 : f32
      %120 = vector.broadcast %119 : f32 to vector<1x1xf32>
      %121 = arith.addf %116, %120 : vector<1x1xf32>
      %c0_56 = arith.constant 0 : index
      %c0_57 = arith.constant 0 : index
      %122 = vector.load %arg11[%c0_56, %c0_57] : memref<1x1xf32, #tpu.memory_space<vmem>>, vector<1x1xf32>
      tpu.vector_store %arg11[%c0_56, %c0_57], %121 {strides = array<i32>} : memref<1x1xf32, #tpu.memory_space<vmem>>, vector<1x1xf32>,
    } else {
    }
    %c0 = arith.constant 0 : index
    %c0_1 = arith.constant 0 : index
    %c0_2 = arith.constant 0 : index
    %3 = vector.load %arg1[%c0, %c0_1, %c0_2] : memref<1x16x16xf32, #tpu.memory_space<vmem>>, vector<1x16x16xf32>
    %4 = vector.shape_cast %3 : vector<1x16x16xf32> to vector<16x16xf32>
    %c0_3 = arith.constant 0 : index
    %c0_4 = arith.constant 0 : index
    %c0_5 = arith.constant 0 : index
    %5 = vector.load %arg2[%c0_3, %c0_4, %c0_5] : memref<1x16x16xf32, #tpu.memory_space<vmem>>, vector<1x16x16xf32>
    %6 = vector.shape_cast %5 : vector<1x16x16xf32> to vector<16x16xf32>
    %7 = arith.subf %6, %4 : vector<16x16xf32>
    %8 = arith.mulf %7, %7 : vector<16x16xf32>
    %cst = arith.constant 1.000000e-18 : f32
    %9 = vector.broadcast %cst : f32 to vector<16x16xf32>
    %10 = arith.addf %8, %9 : vector<16x16xf32>
    %11 = math.sqrt %10 : vector<16x16xf32>
    %12 = math.sqrt %11 : vector<16x16xf32>
    %13 = vector.shape_cast %12 : vector<16x16xf32> to vector<1x16x16xf32>
    %cst_6 = arith.constant dense<0.000000e+00> : vector<1xf32>
    %14 = vector.multi_reduction <add>, %13, %cst_6 [1, 2] : vector<1x16x16xf32> to vector<1xf32>
    %15 = vector.shape_cast %14 : vector<1xf32> to vector<1x1x1xf32>
    %16 = vector.extract %15[0, 0, 0] : f32 from vector<1x1x1xf32>
    %17 = arith.mulf %4, %4 : vector<16x16xf32>
    %18 = arith.mulf %6, %6 : vector<16x16xf32>
    %19 = arith.mulf %4, %6 : vector<16x16xf32>
    %20 = tpu.concatenate %4, %6, %17, %18, %19 in 0 : vector<16x16xf32>, vector<16x16xf32>, vector<16x16xf32>, vector<16x16xf32>, vector<16x16xf32> -> vector<80x16xf32>
    %c0_7 = arith.constant 0 : index
    %c0_8 = arith.constant 0 : index
    %21 = vector.load %arg7[%c0_7, %c0_8] : memref<16x16xf32, #tpu.memory_space<vmem>>, vector<16x16xf32>
    %cst_9 = arith.constant dense<0.000000e+00> : vector<80x16xf32>
    %22 = tpu.matmul %20, %21, %cst_9 {dimension_numbers = #tpu.dot_dimension_numbers<[1], [0], [0], [1], [0, 0, 1, 1], [], []>} : vector<80x16xf32>, vector<16x16xf32>, vector<80x16xf32> -> vector<80x16xf32>
    %c0_10 = arith.constant 0 : index
    %c0_11 = arith.constant 0 : index
    %23 = vector.load %arg8[%c0_10, %c0_11] : memref<80x80xf32, #tpu.memory_space<vmem>>, vector<80x80xf32>
    %cst_12 = arith.constant dense<0.000000e+00> : vector<80x16xf32>
    %24 = tpu.matmul %23, %22, %cst_12 {dimension_numbers = #tpu.dot_dimension_numbers<[1], [0], [0], [1], [0, 0, 1, 1], [], []>} : vector<80x80xf32>, vector<80x16xf32>, vector<80x16xf32> -> vector<80x16xf32>
    %25 = vector.extract_strided_slice %24 {offsets = [0, 0], sizes = [16, 16], strides = [1, 1]} : vector<80x16xf32> to vector<16x16xf32>
    %26 = vector.extract_strided_slice %24 {offsets = [16, 0], sizes = [16, 16], strides = [1, 1]} : vector<80x16xf32> to vector<16x16xf32>
    %27 = vector.extract_strided_slice %24 {offsets = [32, 0], sizes = [16, 16], strides = [1, 1]} : vector<80x16xf32> to vector<16x16xf32>
    %28 = vector.extract_strided_slice %24 {offsets = [48, 0], sizes = [16, 16], strides = [1, 1]} : vector<80x16xf32> to vector<16x16xf32>
    %29 = vector.extract_strided_slice %24 {offsets = [64, 0], sizes = [16, 16], strides = [1, 1]} : vector<80x16xf32> to vector<16x16xf32>
    %30 = arith.mulf %25, %25 : vector<16x16xf32>
    %31 = arith.mulf %26, %26 : vector<16x16xf32>
    %32 = arith.mulf %25, %26 : vector<16x16xf32>
    %33 = arith.subf %27, %30 : vector<16x16xf32>
    %34 = arith.subf %28, %31 : vector<16x16xf32>
    %35 = arith.subf %29, %32 : vector<16x16xf32>
    %cst_13 = arith.constant 2.000000e+00 : f32
    %36 = vector.broadcast %cst_13 : f32 to vector<16x16xf32>
    %37 = arith.mulf %36, %32 : vector<16x16xf32>
    %cst_14 = arith.constant 9.99999974E-5 : f32
    %38 = vector.broadcast %cst_14 : f32 to vector<16x16xf32>
    %39 = arith.addf %37, %38 : vector<16x16xf32>
    %cst_15 = arith.constant 2.000000e+00 : f32
    %40 = vector.broadcast %cst_15 : f32 to vector<16x16xf32>
    %41 = arith.mulf %40, %35 : vector<16x16xf32>
    %cst_16 = arith.constant 8.99999984E-4 : f32
    %42 = vector.broadcast %cst_16 : f32 to vector<16x16xf32>
    %43 = arith.addf %41, %42 : vector<16x16xf32>
    %44 = arith.mulf %39, %43 : vector<16x16xf32>
    %45 = arith.addf %30, %31 : vector<16x16xf32>
    %cst_17 = arith.constant 9.99999974E-5 : f32
    %46 = vector.broadcast %cst_17 : f32 to vector<16x16xf32>
    %47 = arith.addf %45, %46 : vector<16x16xf32>
    %48 = arith.addf %33, %34 : vector<16x16xf32>
    %cst_18 = arith.constant 8.99999984E-4 : f32
    %49 = vector.broadcast %cst_18 : f32 to vector<16x16xf32>
    %50 = arith.addf %48, %49 : vector<16x16xf32>
    %51 = arith.mulf %47, %50 : vector<16x16xf32>
    %52 = arith.divf %44, %51 : vector<16x16xf32>
    %53 = vector.shape_cast %52 : vector<16x16xf32> to vector<1x16x16xf32>
    %cst_19 = arith.constant dense<0.000000e+00> : vector<1xf32>
    %54 = vector.multi_reduction <add>, %53, %cst_19 [1, 2] : vector<1x16x16xf32> to vector<1xf32>
    %55 = vector.shape_cast %54 : vector<1xf32> to vector<1x1x1xf32>
    %56 = vector.extract %55[0, 0, 0] : f32 from vector<1x1x1xf32>
    %c0_20 = arith.constant 0 : index
    %c0_21 = arith.constant 0 : index
    %57 = vector.load %arg11[%c0_20, %c0_21] : memref<1x1xf32, #tpu.memory_space<vmem>>, vector<1x1xf32>
    %cst_22 = arith.constant 1.000000e+00 : f32
    %58 = arith.mulf %cst_22, %16 : f32
    %cst_23 = arith.constant 1.536000e+03 : f32
    %59 = arith.divf %58, %cst_23 : f32
    %cst_24 = arith.constant 5.000000e-01 : f32
    %60 = arith.mulf %cst_24, %56 : f32
    %cst_25 = arith.constant 1.536000e+03 : f32
    %61 = arith.divf %60, %cst_25 : f32
    %62 = arith.subf %59, %61 : f32
    %63 = vector.broadcast %62 : f32 to vector<1x1xf32>
    %64 = arith.addf %57, %63 : vector<1x1xf32>
    %c0_26 = arith.constant 0 : index
    %c0_27 = arith.constant 0 : index
    %65 = vector.load %arg11[%c0_26, %c0_27] : memref<1x1xf32, #tpu.memory_space<vmem>>, vector<1x1xf32>
    tpu.vector_store %arg11[%c0_26, %c0_27], %64 {strides = array<i32>} : memref<1x1xf32, #tpu.memory_space<vmem>>, vector<1x1xf32>,
    return
  }
  func.func @transform_0(%arg0: i32) -> (i32, i32, i32) {
    %c0_i32 = arith.constant 0 : i32
    %c0_i32_0 = arith.constant 0 : i32
    %c0_i32_1 = arith.constant 0 : i32
    return %arg0, %c0_i32, %c0_i32_0 : i32, i32, i32
  }
  func.func @transform_1(%arg0: i32) -> (i32, i32, i32) {
    %c0_i32 = arith.constant 0 : i32
    %c0_i32_0 = arith.constant 0 : i32
    %c0_i32_1 = arith.constant 0 : i32
    return %arg0, %c0_i32, %c0_i32_0 : i32, i32, i32
  }
  func.func @transform_2(%arg0: i32) -> (i32, i32) {
    %c0_i32 = arith.constant 0 : i32
    %c0_i32_0 = arith.constant 0 : i32
    %c0_i32_1 = arith.constant 0 : i32
    return %c0_i32, %c0_i32_0 : i32, i32
  }
  func.func @transform_3(%arg0: i32) -> (i32, i32) {
    %c0_i32 = arith.constant 0 : i32
    %c0_i32_0 = arith.constant 0 : i32
    %c0_i32_1 = arith.constant 0 : i32
    return %c0_i32, %c0_i32_0 : i32, i32
  }
  func.func @transform_4(%arg0: i32) -> (i32, i32) {
    %c0_i32 = arith.constant 0 : i32
    %c0_i32_0 = arith.constant 0 : i32
    %c0_i32_1 = arith.constant 0 : i32
    return %c0_i32, %c0_i32_0 : i32, i32
  }
  func.func @transform_5(%arg0: i32) -> (i32, i32) {
    %c0_i32 = arith.constant 0 : i32
    %c0_i32_0 = arith.constant 0 : i32
    %c0_i32_1 = arith.constant 0 : i32
    return %c0_i32, %c0_i32_0 : i32, i32
  }
  func.func @transform_6(%arg0: i32) -> (i32, i32) {
    %c0_i32 = arith.constant 0 : i32
    %c0_i32_0 = arith.constant 0 : i32
    %c0_i32_1 = arith.constant 0 : i32
    return %c0_i32, %c0_i32_0 : i32, i32
  }
  func.func @transform_7(%arg0: i32) -> (i32, i32) {
    %c0_i32 = arith.constant 0 : i32
    %c0_i32_0 = arith.constant 0 : i32
    %c0_i32_1 = arith.constant 0 : i32
    return %c0_i32, %c0_i32_0 : i32, i32
  }
  func.func @transform_8(%arg0: i32) -> (i32, i32) {
    %c0_i32 = arith.constant 0 : i32
    %c0_i32_0 = arith.constant 0 : i32
    %c0_i32_1 = arith.constant 0 : i32
    return %c0_i32, %c0_i32_0 : i32, i32
  }
  func.func @transform_9(%arg0: i32) -> (i32, i32) {
    %c0_i32 = arith.constant 0 : i32
    %c0_i32_0 = arith.constant 0 : i32
    %c0_i32_1 = arith.constant 0 : i32
    return %c0_i32, %c0_i32_0 : i32, i32
  }
  func.func @transform_10(%arg0: i32) -> (i32, i32) {
    %c0_i32 = arith.constant 0 : i32
    %c0_i32_0 = arith.constant 0 : i32
    %c0_i32_1 = arith.constant 0 : i32
    return %c0_i32, %c0_i32_0 : i32, i32
  }
}

</mosaic_0001>

<llo_original>
// kernel: tpu_custom_call.1
$region0: #{tpu_custom_call.1}
  #allocation0 [shape = 'u32[]', space=smem, size = 0x4, offset = 0x4, fixed_abs, tag = 'smem constant byte address 0x4 - core index']
  #allocation1 [shape = 'u32[144,128]{1,0:T(1,128)}', space=vmem, size = 0x12000, scoped, tag = 'internal scratch']
  %s0 = inlined_call_operand.vmem [shape: f32[6,16,16], index: 0, kind: input, shape index: {}]
  %s1 = inlined_call_operand.hbm [shape: f32[6,16,16], index: 1, kind: input, shape index: {}]
  %s2 = inlined_call_operand.vmem [shape: f32[64,16], index: 2, kind: input, shape index: {}]
  %s3 = inlined_call_operand.vmem [shape: f32[64,16], index: 3, kind: input, shape index: {}]
  %s4 = inlined_call_operand.vmem [shape: f32[1,14], index: 4, kind: input, shape index: {}]
  %s5 = inlined_call_operand.vmem [shape: f32[1,14], index: 5, kind: input, shape index: {}]
  %s6 = inlined_call_operand.hbm [shape: f32[16,16], index: 6, kind: input, shape index: {}]
  %s7 = inlined_call_operand.vmem [shape: f32[80,80], index: 7, kind: input, shape index: {}]
  %s8 = inlined_call_operand.hbm [shape: f32[16,16], index: 8, kind: input, shape index: {}]
  %s9 = inlined_call_operand.vmem [shape: f32[16,16], index: 9, kind: input, shape index: {}]
  %s10 = inlined_call_operand.hbm [shape: f32[1,1], index: 10, kind: output, shape index: {}]
  %s11 = sld [smem:[#allocation0]]
  $region89: #{tpu_custom_call.1} parent=0
    _
  %s13 = ssub.s32 1, %s11
  %s14 = scalar_select 0, %s13, %s11
  $region1: #{tpu_custom_call.1} parent=0
    #allocation2 [shape = 'u8[16384]{0}', space=vmem, size = 0x4000, scoped, tag = 'input window, operand 1']
    #allocation3 [shape = 's32[2]{0}', space=sflag, size = 0x8, scoped, tag = 'scoped memory for tpu_custom_call.1']
    #allocation4 [shape = 's32[2]{0}', space=sflag, size = 0x8, scoped, tag = 'scoped memory for tpu_custom_call.1']
    #allocation5 [shape = 'u8[8192]{0}', space=vmem, size = 0x2000, scoped, tag = 'input window, operand 6, single buffered']
    #allocation6 [shape = 's32[1]{0}', space=sflag, size = 0x4, scoped, tag = 'scoped memory for tpu_custom_call.1']
    #allocation7 [shape = 'u8[8192]{0}', space=vmem, size = 0x2000, scoped, tag = 'input window, operand 8, single buffered']
    #allocation8 [shape = 'u8[512]{0}', space=vmem, size = 0x400, scoped, tag = 'output window, operand 0, single buffered']
    %15 = vsyncpa [#allocation3], 0
    %s16 = scalar_lea.sflag [#allocation3], 1
    %17 = vsyncpa %s16, 0
    %18 = vsyncpa [#allocation6], 0
    %19 = vsyncpa [#allocation4], 0
    loop: start=0, step=1, limit=8
    $region2: #{tpu_custom_call.1} parent=1 // loop_pre_header
      _
    $region3: #{tpu_custom_call.1} parent=1 // loop_header
      %s21 = sphi 0, %s25
      %p22 = scmp.ge.s32.totalorder %s21, 8
      %s31 = sphi 0, %s33
      %s34 = sphi 0, %s31
      %s35 = sphi 0, %s34
      %s51 = sphi 0, %s35
      %s57 = sphi 0, %s59
      %s60 = sphi 0, %s57
      %s61 = sphi 0, %s60
      %s77 = sphi 0, %s61
      %s81 = sphi 0, %s81
      %s83 = sphi 0, %s81
      %s84 = sphi 0, %s83
      %s98 = sphi 0, %s84
      %s102 = sphi 0, %s102
      %s104 = sphi 0, %s102
      %s105 = sphi 0, %s104
      %s119 = sphi 0, %s105
      %s123 = sphi 0, %s123
      %s125 = sphi 0, %s123
      %s126 = sphi 0, %s125
      %s140 = sphi 0, %s126
      %s144 = sphi 0, %s144
      %s146 = sphi 0, %s144
      %s147 = sphi 0, %s146
      %s161 = sphi 0, %s147
      %s165 = sphi 0, %s165
      %s167 = sphi 0, %s165
      %s168 = sphi 0, %s167
      %s182 = sphi 0, %s168
      %s186 = sphi 0, %s186
      %s188 = sphi 0, %s186
      %s189 = sphi 0, %s188
      %s203 = sphi 0, %s189
      %s207 = sphi 0, %s207
      %s209 = sphi 0, %s207
      %s210 = sphi 0, %s209
      %s224 = sphi 0, %s210
      %s228 = sphi 0, %s228
      %s230 = sphi 0, %s228
      %s231 = sphi 0, %s230
      %s245 = sphi 0, %s231
      %s249 = sphi 0, %s249
      %s251 = sphi 0, %s249
      %s252 = sphi 0, %s251
      %s266 = sphi 0, %s252
    $region4: #{tpu_custom_call.1} parent=1 // loop_header_branch
      %24 = sbr.rel (%p22) target = $region8
    $region5: #{tpu_custom_call.1} parent=1 // loop_body
      %s26 = ssub.s32 %s21, 1
      %s27 = ssub.s32 %s21, 2
      %s28 = sadd.s32 %s21, 1
      %s29 = ssub.s32 %s21, %s28
      %p30 = scmp.eq.s32.totalorder %s29, 0
      %s32 = sadd.s32 %s31, 1
      %s33 = scalar_select %p30, %s31, %s32
      %p36 = pneg %p30
      %p37 = scmp.eq.s32.totalorder %s21, 5
      %p38 = por %p36, %p37
      %p39 = scmp.ne.s32.totalorder %s31, %s34
      %p40 = scmp.eq.s32.totalorder %s21, 0
      %p41 = por %p39, %p40
      %p42 = scmp.ne.s32.totalorder %s31, %s34
      %p43 = scmp.eq.s32.totalorder %s26, 5
      %p44 = por %p42, %p43
      %p45 = scmp.ne.s32.totalorder %s34, %s35
      %p46 = scmp.eq.s32.totalorder %s26, 0
      %p47 = por %p45, %p46
      %p48 = scmp.ne.s32.totalorder %s34, %s35
      %p49 = scmp.eq.s32.totalorder %s27, 5
      %p50 = por %p48, %p49
      %p52 = scmp.ne.s32.totalorder %s35, %s51
      %p53 = scmp.eq.s32.totalorder %s27, 0
      %p54 = por %p52, %p53
      %s55 = ssub.s32 %s21, %s28
      %p56 = scmp.eq.s32.totalorder %s55, 0
      %s58 = sadd.s32 %s57, 1
      %s59 = scalar_select %p56, %s57, %s58
      %p62 = pneg %p56
      %p63 = scmp.eq.s32.totalorder %s21, 5
      %p64 = por %p62, %p63
      %p65 = scmp.ne.s32.totalorder %s57, %s60
      %p66 = scmp.eq.s32.totalorder %s21, 0
      %p67 = por %p65, %p66
      %p68 = scmp.ne.s32.totalorder %s57, %s60
      %p69 = scmp.eq.s32.totalorder %s26, 5
      %p70 = por %p68, %p69
      %p71 = scmp.ne.s32.totalorder %s60, %s61
      %p72 = scmp.eq.s32.totalorder %s26, 0
      %p73 = por %p71, %p72
      %p74 = scmp.ne.s32.totalorder %s60, %s61
      %p75 = scmp.eq.s32.totalorder %s27, 5
      %p76 = por %p74, %p75
      %p78 = scmp.ne.s32.totalorder %s61, %s77
      %p79 = scmp.eq.s32.totalorder %s27, 0
      %p80 = por %p78, %p79
      %s82 = sadd.s32 %s81, 1
      %p85 = scmp.eq.s32.totalorder %s21, 5
      %p86 = scmp.ne.s32.totalorder %s81, %s83
      %p87 = scmp.eq.s32.totalorder %s21, 0
      %p88 = por %p86, %p87
      %p89 = scmp.ne.s32.totalorder %s81, %s83
      %p90 = scmp.eq.s32.totalorder %s26, 5
      %p91 = por %p89, %p90
      %p92 = scmp.ne.s32.totalorder %s83, %s84
      %p93 = scmp.eq.s32.totalorder %s26, 0
      %p94 = por %p92, %p93
      %p95 = scmp.ne.s32.totalorder %s83, %s84
      %p96 = scmp.eq.s32.totalorder %s27, 5
      %p97 = por %p95, %p96
      %p99 = scmp.ne.s32.totalorder %s84, %s98
      %p100 = scmp.eq.s32.totalorder %s27, 0
      %p101 = por %p99, %p100
      %s103 = sadd.s32 %s102, 1
      %p106 = scmp.eq.s32.totalorder %s21, 5
      %p107 = scmp.ne.s32.totalorder %s102, %s104
      %p108 = scmp.eq.s32.totalorder %s21, 0
      %p109 = por %p107, %p108
      %p110 = scmp.ne.s32.totalorder %s102, %s104
      %p111 = scmp.eq.s32.totalorder %s26, 5
      %p112 = por %p110, %p111
      %p113 = scmp.ne.s32.totalorder %s104, %s105
      %p114 = scmp.eq.s32.totalorder %s26, 0
      %p115 = por %p113, %p114
      %p116 = scmp.ne.s32.totalorder %s104, %s105
      %p117 = scmp.eq.s32.totalorder %s27, 5
      %p118 = por %p116, %p117
      %p120 = scmp.ne.s32.totalorder %s105, %s119
      %p121 = scmp.eq.s32.totalorder %s27, 0
      %p122 = por %p120, %p121
      %s124 = sadd.s32 %s123, 1
      %p127 = scmp.eq.s32.totalorder %s21, 5
      %p128 = scmp.ne.s32.totalorder %s123, %s125
      %p129 = scmp.eq.s32.totalorder %s21, 0
      %p130 = por %p128, %p129
      %p131 = scmp.ne.s32.totalorder %s123, %s125
      %p132 = scmp.eq.s32.totalorder %s26, 5
      %p133 = por %p131, %p132
      %p134 = scmp.ne.s32.totalorder %s125, %s126
      %p135 = scmp.eq.s32.totalorder %s26, 0
      %p136 = por %p134, %p135
      %p137 = scmp.ne.s32.totalorder %s125, %s126
      %p138 = scmp.eq.s32.totalorder %s27, 5
      %p139 = por %p137, %p138
      %p141 = scmp.ne.s32.totalorder %s126, %s140
      %p142 = scmp.eq.s32.totalorder %s27, 0
      %p143 = por %p141, %p142
      %s145 = sadd.s32 %s144, 1
      %p148 = scmp.eq.s32.totalorder %s21, 5
      %p149 = scmp.ne.s32.totalorder %s144, %s146
      %p150 = scmp.eq.s32.totalorder %s21, 0
      %p151 = por %p149, %p150
      %p152 = scmp.ne.s32.totalorder %s144, %s146
      %p153 = scmp.eq.s32.totalorder %s26, 5
      %p154 = por %p152, %p153
      %p155 = scmp.ne.s32.totalorder %s146, %s147
      %p156 = scmp.eq.s32.totalorder %s26, 0
      %p157 = por %p155, %p156
      %p158 = scmp.ne.s32.totalorder %s146, %s147
      %p159 = scmp.eq.s32.totalorder %s27, 5
      %p160 = por %p158, %p159
      %p162 = scmp.ne.s32.totalorder %s147, %s161
      %p163 = scmp.eq.s32.totalorder %s27, 0
      %p164 = por %p162, %p163
      %s166 = sadd.s32 %s165, 1
      %p169 = scmp.eq.s32.totalorder %s21, 5
      %p170 = scmp.ne.s32.totalorder %s165, %s167
      %p171 = scmp.eq.s32.totalorder %s21, 0
      %p172 = por %p170, %p171
      %p173 = scmp.ne.s32.totalorder %s165, %s167
      %p174 = scmp.eq.s32.totalorder %s26, 5
      %p175 = por %p173, %p174
      %p176 = scmp.ne.s32.totalorder %s167, %s168
      %p177 = scmp.eq.s32.totalorder %s26, 0
      %p178 = por %p176, %p177
      %p179 = scmp.ne.s32.totalorder %s167, %s168
      %p180 = scmp.eq.s32.totalorder %s27, 5
      %p181 = por %p179, %p180
      %p183 = scmp.ne.s32.totalorder %s168, %s182
      %p184 = scmp.eq.s32.totalorder %s27, 0
      %p185 = por %p183, %p184
      %s187 = sadd.s32 %s186, 1
      %p190 = scmp.eq.s32.totalorder %s21, 5
      %p191 = scmp.ne.s32.totalorder %s186, %s188
      %p192 = scmp.eq.s32.totalorder %s21, 0
      %p193 = por %p191, %p192
      %p194 = scmp.ne.s32.totalorder %s186, %s188
      %p195 = scmp.eq.s32.totalorder %s26, 5
      %p196 = por %p194, %p195
      %p197 = scmp.ne.s32.totalorder %s188, %s189
      %p198 = scmp.eq.s32.totalorder %s26, 0
      %p199 = por %p197, %p198
      %p200 = scmp.ne.s32.totalorder %s188, %s189
      %p201 = scmp.eq.s32.totalorder %s27, 5
      %p202 = por %p200, %p201
      %p204 = scmp.ne.s32.totalorder %s189, %s203
      %p205 = scmp.eq.s32.totalorder %s27, 0
      %p206 = por %p204, %p205
      %s208 = sadd.s32 %s207, 1
      %p211 = scmp.eq.s32.totalorder %s21, 5
      %p212 = scmp.ne.s32.totalorder %s207, %s209
      %p213 = scmp.eq.s32.totalorder %s21, 0
      %p214 = por %p212, %p213
      %p215 = scmp.ne.s32.totalorder %s207, %s209
      %p216 = scmp.eq.s32.totalorder %s26, 5
      %p217 = por %p215, %p216
      %p218 = scmp.ne.s32.totalorder %s209, %s210
      %p219 = scmp.eq.s32.totalorder %s26, 0
      %p220 = por %p218, %p219
      %p221 = scmp.ne.s32.totalorder %s209, %s210
      %p222 = scmp.eq.s32.totalorder %s27, 5
      %p223 = por %p221, %p222
      %p225 = scmp.ne.s32.totalorder %s210, %s224
      %p226 = scmp.eq.s32.totalorder %s27, 0
      %p227 = por %p225, %p226
      %s229 = sadd.s32 %s228, 1
      %p232 = scmp.eq.s32.totalorder %s21, 5
      %p233 = scmp.ne.s32.totalorder %s228, %s230
      %p234 = scmp.eq.s32.totalorder %s21, 0
      %p235 = por %p233, %p234
      %p236 = scmp.ne.s32.totalorder %s228, %s230
      %p237 = scmp.eq.s32.totalorder %s26, 5
      %p238 = por %p236, %p237
      %p239 = scmp.ne.s32.totalorder %s230, %s231
      %p240 = scmp.eq.s32.totalorder %s26, 0
      %p241 = por %p239, %p240
      %p242 = scmp.ne.s32.totalorder %s230, %s231
      %p243 = scmp.eq.s32.totalorder %s27, 5
      %p244 = por %p242, %p243
      %p246 = scmp.ne.s32.totalorder %s231, %s245
      %p247 = scmp.eq.s32.totalorder %s27, 0
      %p248 = por %p246, %p247
      %s250 = sadd.s32 %s249, 1
      %p253 = scmp.eq.s32.totalorder %s21, 5
      %p254 = scmp.ne.s32.totalorder %s249, %s251
      %p255 = scmp.eq.s32.totalorder %s21, 0
      %p256 = por %p254, %p255
      %p257 = scmp.ne.s32.totalorder %s249, %s251
      %p258 = scmp.eq.s32.totalorder %s26, 5
      %p259 = por %p257, %p258
      %p260 = scmp.ne.s32.totalorder %s251, %s252
      %p261 = scmp.eq.s32.totalorder %s26, 0
      %p262 = por %p260, %p261
      %p263 = scmp.ne.s32.totalorder %s251, %s252
      %p264 = scmp.eq.s32.totalorder %s27, 5
      %p265 = por %p263, %p264
      %p267 = scmp.ne.s32.totalorder %s252, %s266
      %p268 = scmp.eq.s32.totalorder %s27, 0
      %p269 = por %p267, %p268
      %p270 = scmp.le.s32.totalorder 1, %s21
      %p271 = scmp.lt.s32.totalorder %s21, 7
      %p272 = pnand %p270, %p271
      %p273 = pneg %p272
      // Predicated region
      $region9: #{tpu_custom_call.1} parent=5 // pred_check
        _
      $region10: #{tpu_custom_call.1} parent=5 // pred_check_branch
        %275 = sbr.rel (%p272) target = $region12
      $region11: #{tpu_custom_call.1} parent=5 // pred_region
        %s276 = ssub.s32 %s21, 1
        // Predicated region
        $region13: #{tpu_custom_call.1} parent=11 // pred_check
          %p277 = pneg %p94
        $region14: #{tpu_custom_call.1} parent=11 // pred_check_branch
          %279 = sbr.rel (%p277) target = $region16
        $region15: #{tpu_custom_call.1} parent=11 // pred_region
          _
        $region16: #{tpu_custom_call.1} parent=11 // pred_fallthru
          _
        // Predicated region
        $region17: #{tpu_custom_call.1} parent=11 // pred_check
          %p280 = pneg %p115
        $region18: #{tpu_custom_call.1} parent=11 // pred_check_branch
          %282 = sbr.rel (%p280) target = $region20
        $region19: #{tpu_custom_call.1} parent=11 // pred_region
          _
        $region20: #{tpu_custom_call.1} parent=11 // pred_fallthru
          _
        // Predicated region
        $region21: #{tpu_custom_call.1} parent=11 // pred_check
          %p283 = pneg %p136
        $region22: #{tpu_custom_call.1} parent=11 // pred_check_branch
          %285 = sbr.rel (%p283) target = $region24
        $region23: #{tpu_custom_call.1} parent=11 // pred_region
          _
        $region24: #{tpu_custom_call.1} parent=11 // pred_fallthru
          _
        // Predicated region
        $region25: #{tpu_custom_call.1} parent=11 // pred_check
          %p286 = pneg %p157
        $region26: #{tpu_custom_call.1} parent=11 // pred_check_branch
          %288 = sbr.rel (%p286) target = $region28
        $region27: #{tpu_custom_call.1} parent=11 // pred_region
          _
        $region28: #{tpu_custom_call.1} parent=11 // pred_fallthru
          _
        // Predicated region
        $region29: #{tpu_custom_call.1} parent=11 // pred_check
          %p289 = pneg %p178
        $region30: #{tpu_custom_call.1} parent=11 // pred_check_branch
          %291 = sbr.rel (%p289) target = $region32
        $region31: #{tpu_custom_call.1} parent=11 // pred_region
          %s293 = ssub.s32 256, 256
          %294 = vsyncadd [#allocation6], %s293
          %s295 = sshll.u32 [#allocation5], 4
          %s296 = int_to_ptr.vmem [resolvable:$true] %s295
          %301 = dma.hbm_to_vmem [thread:$0]  %s6, 256, %s296, [#allocation6], 128, 128, 8
        $region32: #{tpu_custom_call.1} parent=11 // pred_fallthru
          _
        // Predicated region
        $region33: #{tpu_custom_call.1} parent=11 // pred_check
          %p302 = pneg %p199
        $region34: #{tpu_custom_call.1} parent=11 // pred_check_branch
          %304 = sbr.rel (%p302) target = $region36
        $region35: #{tpu_custom_call.1} parent=11 // pred_region
          _
        $region36: #{tpu_custom_call.1} parent=11 // pred_fallthru
          _
        // Predicated region
        $region37: #{tpu_custom_call.1} parent=11 // pred_check
          %p305 = pneg %p220
        $region38: #{tpu_custom_call.1} parent=11 // pred_check_branch
          %307 = sbr.rel (%p305) target = $region40
        $region39: #{tpu_custom_call.1} parent=11 // pred_region
          %s309 = ssub.s32 256, 256
          %310 = vsyncadd [#allocation6], %s309
          %s311 = sshll.u32 [#allocation7], 4
          %s312 = int_to_ptr.vmem [resolvable:$true] %s311
          %317 = dma.hbm_to_vmem [thread:$0]  %s8, 256, %s312, [#allocation6], 128, 128, 8
        $region40: #{tpu_custom_call.1} parent=11 // pred_fallthru
          _
        // Predicated region
        $region41: #{tpu_custom_call.1} parent=11 // pred_check
          %p318 = pneg %p241
        $region42: #{tpu_custom_call.1} parent=11 // pred_check_branch
          %320 = sbr.rel (%p318) target = $region44
        $region43: #{tpu_custom_call.1} parent=11 // pred_region
          _
        $region44: #{tpu_custom_call.1} parent=11 // pred_fallthru
          _
      $region12: #{tpu_custom_call.1} parent=5 // pred_fallthru
        _
      %p321 = scmp.lt.s32.totalorder %s21, 6
      // Predicated region
      $region45: #{tpu_custom_call.1} parent=5 // pred_check
        %p322 = pneg %p321
      $region46: #{tpu_custom_call.1} parent=5 // pred_check_branch
        %324 = sbr.rel (%p322) target = $region48
      $region47: #{tpu_custom_call.1} parent=5 // pred_region
        // Predicated region
        $region49: #{tpu_custom_call.1} parent=47 // pred_check
          %p325 = pneg %p41
        $region50: #{tpu_custom_call.1} parent=47 // pred_check_branch
          %327 = sbr.rel (%p325) target = $region52
        $region51: #{tpu_custom_call.1} parent=47 // pred_region
          %p328 = scmp.lt.s32.totalorder %s21, 5
          %s329 = scalar_select %p328, %s21, 5
          %s330 = smul.addr %s329, 2
          %s331 = smul.addr %s330, 8
          %s332 = scalar_lea.vmem %s0, %s331
        $region52: #{tpu_custom_call.1} parent=47 // pred_fallthru
          _
        // Predicated region
        $region53: #{tpu_custom_call.1} parent=47 // pred_check
          %p333 = pneg %p67
        $region54: #{tpu_custom_call.1} parent=47 // pred_check_branch
          %335 = sbr.rel (%p333) target = $region56
        $region55: #{tpu_custom_call.1} parent=47 // pred_region
          %s336 = sand.u32 %s57, 1
          %s337 = scalar_lea.sflag [#allocation3], %s336
          %s338 = sand.u32 %s57, 1
          %s339 = smul.addr %s338, 16
          %s340 = scalar_lea.vmem [#allocation2], %s339
          %s342 = ssub.s32 256, 256
          %343 = vsyncadd %s337, %s342
          %s344 = smul.addr %s21, 2
          %s345 = smul.addr %s344, 128
          %s346 = scalar_lea.hbm %s1, %s345
          %s347 = sshll.u32 %s340, 4
          %s348 = int_to_ptr.vmem [resolvable:$true] %s347
          %353 = dma.hbm_to_vmem [thread:$0]  %s346, 256, %s348, %s337, 128, 128, 8
        $region56: #{tpu_custom_call.1} parent=47 // pred_fallthru
          _
      $region48: #{tpu_custom_call.1} parent=5 // pred_fallthru
        _
      %p354 = scmp.le.s32.totalorder 1, %s21
      %p355 = scmp.lt.s32.totalorder %s21, 7
      %p356 = pnand %p354, %p355
      %p357 = pneg %p356
      // Predicated region
      $region57: #{tpu_custom_call.1} parent=5 // pred_check
        _
      $region58: #{tpu_custom_call.1} parent=5 // pred_check_branch
        %359 = sbr.rel (%p356) target = $region60
      $region59: #{tpu_custom_call.1} parent=5 // pred_region
        %s360 = ssub.s32 %s21, 1
        %s361 = sand.u32 %s60, 1
        %s362 = scalar_lea.sflag [#allocation3], %s361
        %s363 = sand.u32 %s60, 1
        %s364 = smul.addr %s363, 16
        %s365 = scalar_lea.vmem [#allocation2], %s364
        // Predicated region
        $region61: #{tpu_custom_call.1} parent=59 // pred_check
          %p366 = pneg %p73
        $region62: #{tpu_custom_call.1} parent=59 // pred_check_branch
          %368 = sbr.rel (%p366) target = $region64
        $region63: #{tpu_custom_call.1} parent=59 // pred_region
          %369 = dma.done %s362, 256
        $region64: #{tpu_custom_call.1} parent=59 // pred_fallthru
          _
        // Predicated region
        $region65: #{tpu_custom_call.1} parent=59 // pred_check
          %p370 = pneg %p178
        $region66: #{tpu_custom_call.1} parent=59 // pred_check_branch
          %372 = sbr.rel (%p370) target = $region68
        $region67: #{tpu_custom_call.1} parent=59 // pred_region
          %373 = dma.done [#allocation6], 256
        $region68: #{tpu_custom_call.1} parent=59 // pred_fallthru
          _
        // Predicated region
        $region69: #{tpu_custom_call.1} parent=59 // pred_check
          %p374 = pneg %p220
        $region70: #{tpu_custom_call.1} parent=59 // pred_check_branch
          %376 = sbr.rel (%p374) target = $region72
        $region71: #{tpu_custom_call.1} parent=59 // pred_region
          %377 = dma.done [#allocation6], 256
        $region72: #{tpu_custom_call.1} parent=59 // pred_fallthru
          _
        %p378 = scmp.lt.s32.totalorder %s26, 5
        %s379 = scalar_select %p378, %s26, 5
        %s380 = smul.addr %s379, 2
        %s381 = smul.addr %s380, 8
        %s382 = scalar_lea.vmem %s0, %s381
        %p383 = pneg %p47
        %p384 = pneg %p44
        %s385 = sand.u32 %s60, 1
        %s386 = scalar_lea.sflag [#allocation3], %s385
        %s387 = sand.u32 %s60, 1
        %s388 = smul.addr %s387, 16
        %s389 = scalar_lea.vmem [#allocation2], %s388
        %p390 = pneg %p73
        %p391 = pneg %p70
        %p392 = pneg %p94
        %p393 = pneg %p91
        %p394 = pneg %p115
        %p395 = pneg %p112
        %p396 = pneg %p136
        %p397 = pneg %p133
        %p398 = pneg %p157
        %p399 = pneg %p154
        %p400 = pneg %p178
        %p401 = pneg %p175
        %p402 = pneg %p199
        %p403 = pneg %p196
        %p404 = pneg %p220
        %p405 = pneg %p217
        %p406 = pneg %p241
        %p407 = pneg %p238
        %p408 = pneg %p262
        %p409 = pneg %p259
        %p410 = scmp.lt.s32.totalorder %s26, 5
        %s411 = scalar_select %p410, %s26, 5
        %s412 = smul.addr %s411, 2
        %s413 = smul.addr %s412, 8
        %s414 = scalar_lea.vmem %s0, %s413
        %p415 = scmp.eq.s32.totalorder %s26, 0
        // Predicated region
        $region73: #{tpu_custom_call.1} parent=59 // pred_check
          %p416 = pneg %p415
        $region74: #{tpu_custom_call.1} parent=59 // pred_check_branch
          %418 = sbr.rel (%p416) target = $region76
        $region75: #{tpu_custom_call.1} parent=59 // pred_region
          %v419 = vld [vmem:[%s2] sm:$0xff]
          %v420 = vld [vmem:[%s2 + $0x8] sm:$0xff]
          %v421 = vld [vmem:[%s2 + $0x10] sm:$0xff]
          %v422 = vld [vmem:[%s2 + $0x18] sm:$0xff]
          %v423 = vld [vmem:[%s2 + $0x20] sm:$0xff]
          %v424 = vld [vmem:[%s2 + $0x28] sm:$0xff]
          %v425 = vld [vmem:[%s2 + $0x30] sm:$0xff]
          %v426 = vld [vmem:[%s2 + $0x38] sm:$0xff]
          %v427 = vld [vmem:[%s3] sm:$0xff]
          %v428 = vld [vmem:[%s3 + $0x8] sm:$0xff]
          %v429 = vld [vmem:[%s3 + $0x10] sm:$0xff]
          %v430 = vld [vmem:[%s3 + $0x18] sm:$0xff]
          %v431 = vld [vmem:[%s3 + $0x20] sm:$0xff]
          %v432 = vld [vmem:[%s3 + $0x28] sm:$0xff]
          %v433 = vld [vmem:[%s3 + $0x30] sm:$0xff]
          %v434 = vld [vmem:[%s3 + $0x38] sm:$0xff]
          %v435 = vld [vmem:[%s9] sm:$0xff]
          %v436 = vld [vmem:[%s9 + $0x8] sm:$0xff]
          %vm437 = vcmask 130048
          %v439 = vsel %vm437, %v419, 0
          %v442 = vsel %vm437, %v420, 0
          %v445 = vsel %vm437, %v421, 0
          %v448 = vsel %vm437, %v422, 0
          %v451 = vsel %vm437, %v423, 0
          %v454 = vsel %vm437, %v424, 0
          %v457 = vsel %vm437, %v425, 0
          %v460 = vsel %vm437, %v426, 0
          %462 = vmatprep.subr.mxu0 0.0
          %463 = vmatpush1.msra.mxu0 %v435
          %464 = vmatprep.subr.mxu0 0.0
          %465 = vmatpush1.msra.mxu0 %v436
          %466 = vmatprep.subr.mxu0 0.0
          %467 = vmatpush1.msra.mxu0 0.0
          %468 = vmatprep.subr.mxu0 0.0
          %469 = vmatpush1.msra.mxu0 0.0
          %470 = vmatprep.subr.mxu0 0.0
          %471 = vmatpush1.msra.mxu0 0.0
          %472 = vmatprep.subr.mxu0 0.0
          %473 = vmatpush1.msra.mxu0 0.0
          %474 = vmatprep.subr.mxu0 0.0
          %475 = vmatpush1.msra.mxu0 0.0
          %476 = vmatprep.subr.mxu0 0.0
          %477 = vmatpush1.msra.mxu0 0.0
          %478 = vmatprep.subr.mxu0 0.0
          %479 = vmatpush1.msra.mxu0 0.0
          %480 = vmatprep.subr.mxu0 0.0
          %481 = vmatpush1.msra.mxu0 0.0
          %482 = vmatprep.subr.mxu0 0.0
          %483 = vmatpush1.msra.mxu0 0.0
          %484 = vmatprep.subr.mxu0 0.0
          %485 = vmatpush1.msra.mxu0 0.0
          %486 = vmatprep.subr.mxu0 0.0
          %487 = vmatpush1.msra.mxu0 0.0
          %488 = vmatprep.subr.mxu0 0.0
          %489 = vmatpush1.msra.mxu0 0.0
          %490 = vmatprep.subr.mxu0 0.0
          %491 = vmatpush1.msra.mxu0 0.0
          %492 = vmatprep.subr.mxu0 0.0
          %493 = vmatpush1.msra.mxu0 0.0
          %494 = vmatprep.subr.mxu0 0.0
          %495 = vmatpush1.msra.mxu0 0.0
          %496 = vmatprep.subr.mxu0 0.0
          %497 = vmatpush1.msra.mxu0 0.0
          %498 = vmatprep.subr.mxu0 0.0
          %499 = vmatpush1.msra.mxu0 0.0
          %500 = vmatprep.subr.mxu0 0.0
          %501 = vmatpush1.msra.mxu0 0.0
          %502 = vmatprep.subr.mxu0 0.0
          %503 = vmatpush1.msra.mxu0 0.0
          %504 = vmatprep.subr.mxu0 0.0
          %505 = vmatpush1.msra.mxu0 0.0
          %506 = vmatprep.subr.mxu0 0.0
          %507 = vmatpush1.msra.mxu0 0.0
          %508 = vmatprep.subr.mxu0 0.0
          %509 = vmatpush1.msra.mxu0 0.0
          %510 = vmatprep.subr.mxu0 0.0
          %511 = vmatpush1.msra.mxu0 0.0
          %512 = vmatprep.subr.mxu0 0.0
          %513 = vmatpush1.msra.mxu0 0.0
          %514 = vmatprep.subr.mxu0 0.0
          %515 = vmatpush1.msra.mxu0 0.0
          %516 = vmatprep.subr.mxu0 0.0
          %517 = vmatpush1.msra.mxu0 0.0
          %518 = vmatprep.subr.mxu0 0.0
          %519 = vmatpush1.msra.mxu0 0.0
          %520 = vmatprep.subr.mxu0 0.0
          %521 = vmatpush1.msra.mxu0 0.0
          %522 = vmatprep.subr.mxu0 0.0
          %523 = vmatpush1.msra.mxu0 0.0
          %524 = vmatprep.subr.mxu0 0.0
          %525 = vmatpush1.msra.mxu0 0.0
          %526 = vmatprep.mubr.f32.mxu0 0.0
          %527 = vmatmul.mubr.f32.gmra.mrb[0].mxu0 %v439
          %v528 = vpop.f32.mrb[0].mxu0
          %v529 = vadd.f32 0.0, %v528
          %v530 = vpop.f32.mrb[0].mxu0
          %531 = vmatprep.mubr.f32.mxu0 0.0
          %532 = vmatmul.mubr.f32.gmra.mrb[0].mxu0 %v442
          %v533 = vpop.f32.mrb[0].mxu0
          %v534 = vadd.f32 0.0, %v533
          %v535 = vpop.f32.mrb[0].mxu0
          %536 = vmatprep.mubr.f32.mxu0 0.0
          %537 = vmatmul.mubr.f32.gmra.mrb[0].mxu0 %v445
          %v538 = vpop.f32.mrb[0].mxu0
          %v539 = vadd.f32 0.0, %v538
          %v540 = vpop.f32.mrb[0].mxu0
          %541 = vmatprep.mubr.f32.mxu0 0.0
          %542 = vmatmul.mubr.f32.gmra.mrb[0].mxu0 %v448
          %v543 = vpop.f32.mrb[0].mxu0
          %v544 = vadd.f32 0.0, %v543
          %v545 = vpop.f32.mrb[0].mxu0
          %546 = vmatprep.mubr.f32.mxu0 0.0
          %547 = vmatmul.mubr.f32.gmra.mrb[0].mxu0 %v451
          %v548 = vpop.f32.mrb[0].mxu0
          %v549 = vadd.f32 0.0, %v548
          %v550 = vpop.f32.mrb[0].mxu0
          %551 = vmatprep.mubr.f32.mxu0 0.0
          %552 = vmatmul.mubr.f32.gmra.mrb[0].mxu0 %v454
          %v553 = vpop.f32.mrb[0].mxu0
          %v554 = vadd.f32 0.0, %v553
          %v555 = vpop.f32.mrb[0].mxu0
          %556 = vmatprep.mubr.f32.mxu0 0.0
          %557 = vmatmul.mubr.f32.gmra.mrb[0].mxu0 %v457
          %v558 = vpop.f32.mrb[0].mxu0
          %v559 = vadd.f32 0.0, %v558
          %v560 = vpop.f32.mrb[0].mxu0
          %561 = vmatprep.mubr.f32.mxu0 0.0
          %562 = vmatmul.mubr.f32.gmra.mrb[0].mxu0 %v460
          %v563 = vpop.f32.mrb[0].mxu0
          %v564 = vadd.f32 0.0, %v563
          %v565 = vpop.f32.mrb[0].mxu0
          %566 = vdwg.mxu0
          %v567 = vsub.f32 %v419, %v529
          %v568 = vsub.f32 %v420, %v534
          %v569 = vsub.f32 %v421, %v539
          %v570 = vsub.f32 %v422, %v544
          %v571 = vsub.f32 %v423, %v549
          %v572 = vsub.f32 %v424, %v554
          %v573 = vsub.f32 %v425, %v559
          %v574 = vsub.f32 %v426, %v564
          %v575 = vld [vmem:[#allocation7] sm:$0xff]
          %v576 = vld [vmem:[#allocation7 + $0x8] sm:$0xff]
          %v578 = vsel %vm437, %v427, 0
          %v581 = vsel %vm437, %v428, 0
          %v584 = vsel %vm437, %v429, 0
          %v587 = vsel %vm437, %v430, 0
          %v590 = vsel %vm437, %v431, 0
          %v593 = vsel %vm437, %v432, 0
          %v596 = vsel %vm437, %v433, 0
          %v599 = vsel %vm437, %v434, 0
          %601 = vmatprep.subr.mxu0 0.0
          %602 = vmatpush1.msra.mxu0 %v575
          %603 = vmatprep.subr.mxu0 0.0
          %604 = vmatpush1.msra.mxu0 %v576
          %605 = vmatprep.subr.mxu0 0.0
          %606 = vmatpush1.msra.mxu0 0.0
          %607 = vmatprep.subr.mxu0 0.0
          %608 = vmatpush1.msra.mxu0 0.0
          %609 = vmatprep.subr.mxu0 0.0
          %610 = vmatpush1.msra.mxu0 0.0
          %611 = vmatprep.subr.mxu0 0.0
          %612 = vmatpush1.msra.mxu0 0.0
          %613 = vmatprep.subr.mxu0 0.0
          %614 = vmatpush1.msra.mxu0 0.0
          %615 = vmatprep.subr.mxu0 0.0
          %616 = vmatpush1.msra.mxu0 0.0
          %617 = vmatprep.subr.mxu0 0.0
          %618 = vmatpush1.msra.mxu0 0.0
          %619 = vmatprep.subr.mxu0 0.0
          %620 = vmatpush1.msra.mxu0 0.0
          %621 = vmatprep.subr.mxu0 0.0
          %622 = vmatpush1.msra.mxu0 0.0
          %623 = vmatprep.subr.mxu0 0.0
          %624 = vmatpush1.msra.mxu0 0.0
          %625 = vmatprep.subr.mxu0 0.0
          %626 = vmatpush1.msra.mxu0 0.0
          %627 = vmatprep.subr.mxu0 0.0
          %628 = vmatpush1.msra.mxu0 0.0
          %629 = vmatprep.subr.mxu0 0.0
          %630 = vmatpush1.msra.mxu0 0.0
          %631 = vmatprep.subr.mxu0 0.0
          %632 = vmatpush1.msra.mxu0 0.0
          %633 = vmatprep.subr.mxu0 0.0
          %634 = vmatpush1.msra.mxu0 0.0
          %635 = vmatprep.subr.mxu0 0.0
          %636 = vmatpush1.msra.mxu0 0.0
          %637 = vmatprep.subr.mxu0 0.0
          %638 = vmatpush1.msra.mxu0 0.0
          %639 = vmatprep.subr.mxu0 0.0
          %640 = vmatpush1.msra.mxu0 0.0
          %641 = vmatprep.subr.mxu0 0.0
          %642 = vmatpush1.msra.mxu0 0.0
          %643 = vmatprep.subr.mxu0 0.0
          %644 = vmatpush1.msra.mxu0 0.0
          %645 = vmatprep.subr.mxu0 0.0
          %646 = vmatpush1.msra.mxu0 0.0
          %647 = vmatprep.subr.mxu0 0.0
          %648 = vmatpush1.msra.mxu0 0.0
          %649 = vmatprep.subr.mxu0 0.0
          %650 = vmatpush1.msra.mxu0 0.0
          %651 = vmatprep.subr.mxu0 0.0
          %652 = vmatpush1.msra.mxu0 0.0
          %653 = vmatprep.subr.mxu0 0.0
          %654 = vmatpush1.msra.mxu0 0.0
          %655 = vmatprep.subr.mxu0 0.0
          %656 = vmatpush1.msra.mxu0 0.0
          %657 = vmatprep.subr.mxu0 0.0
          %658 = vmatpush1.msra.mxu0 0.0
          %659 = vmatprep.subr.mxu0 0.0
          %660 = vmatpush1.msra.mxu0 0.0
          %661 = vmatprep.subr.mxu0 0.0
          %662 = vmatpush1.msra.mxu0 0.0
          %663 = vmatprep.subr.mxu0 0.0
          %664 = vmatpush1.msra.mxu0 0.0
          %665 = vmatprep.mubr.f32.mxu0 0.0
          %666 = vmatmul.mubr.f32.gmra.mrb[0].mxu0 %v578
          %v667 = vpop.f32.mrb[0].mxu0
          %v668 = vadd.f32 0.0, %v667
          %v669 = vpop.f32.mrb[0].mxu0
          %670 = vmatprep.mubr.f32.mxu0 0.0
          %671 = vmatmul.mubr.f32.gmra.mrb[0].mxu0 %v581
          %v672 = vpop.f32.mrb[0].mxu0
          %v673 = vadd.f32 0.0, %v672
          %v674 = vpop.f32.mrb[0].mxu0
          %675 = vmatprep.mubr.f32.mxu0 0.0
          %676 = vmatmul.mubr.f32.gmra.mrb[0].mxu0 %v584
          %v677 = vpop.f32.mrb[0].mxu0
          %v678 = vadd.f32 0.0, %v677
          %v679 = vpop.f32.mrb[0].mxu0
          %680 = vmatprep.mubr.f32.mxu0 0.0
          %681 = vmatmul.mubr.f32.gmra.mrb[0].mxu0 %v587
          %v682 = vpop.f32.mrb[0].mxu0
          %v683 = vadd.f32 0.0, %v682
          %v684 = vpop.f32.mrb[0].mxu0
          %685 = vmatprep.mubr.f32.mxu0 0.0
          %686 = vmatmul.mubr.f32.gmra.mrb[0].mxu0 %v590
          %v687 = vpop.f32.mrb[0].mxu0
          %v688 = vadd.f32 0.0, %v687
          %v689 = vpop.f32.mrb[0].mxu0
          %690 = vmatprep.mubr.f32.mxu0 0.0
          %691 = vmatmul.mubr.f32.gmra.mrb[0].mxu0 %v593
          %v692 = vpop.f32.mrb[0].mxu0
          %v693 = vadd.f32 0.0, %v692
          %v694 = vpop.f32.mrb[0].mxu0
          %695 = vmatprep.mubr.f32.mxu0 0.0
          %696 = vmatmul.mubr.f32.gmra.mrb[0].mxu0 %v596
          %v697 = vpop.f32.mrb[0].mxu0
          %v698 = vadd.f32 0.0, %v697
          %v699 = vpop.f32.mrb[0].mxu0
          %700 = vmatprep.mubr.f32.mxu0 0.0
          %701 = vmatmul.mubr.f32.gmra.mrb[0].mxu0 %v599
          %v702 = vpop.f32.mrb[0].mxu0
          %v703 = vadd.f32 0.0, %v702
          %v704 = vpop.f32.mrb[0].mxu0
          %705 = vdwg.mxu0
          %v706 = vsub.f32 %v427, %v668
          %v707 = vsub.f32 %v428, %v673
          %v708 = vsub.f32 %v429, %v678
          %v709 = vsub.f32 %v430, %v683
          %v710 = vsub.f32 %v431, %v688
          %v711 = vsub.f32 %v432, %v693
          %v712 = vsub.f32 %v433, %v698
          %v713 = vsub.f32 %v434, %v703
          %v714 = vmul.f32 %v567, %v567
          %v715 = vmul.f32 %v568, %v568
          %v716 = vmul.f32 %v569, %v569
          %v717 = vmul.f32 %v570, %v570
          %v718 = vmul.f32 %v571, %v571
          %v719 = vmul.f32 %v572, %v572
          %v720 = vmul.f32 %v573, %v573
          %v721 = vmul.f32 %v574, %v574
          %v722 = vadd.f32 %v714, 1e-18
          %v723 = vadd.f32 %v715, 1e-18
          %v724 = vadd.f32 %v716, 1e-18
          %v725 = vadd.f32 %v717, 1e-18
          %v726 = vadd.f32 %v718, 1e-18
          %v727 = vadd.f32 %v719, 1e-18
          %v728 = vadd.f32 %v720, 1e-18
          %v729 = vadd.f32 %v721, 1e-18
          %v730 = vrsqrt.pop %v722
          %v731 = vmul.f32 %v722, %v730
          %vm732 = vcmp.eq.f32.partialorder %v722, inf
          %v733 = vsel %vm732, %v722, %v731
          %vm734 = vcmp.eq.f32.partialorder %v722, 0.0
          %v735 = vand.u32 %v722, 2147483648
          %v736 = vsel %vm734, %v735, %v733
          %v737 = vrsqrt.pop %v723
          %v738 = vmul.f32 %v723, %v737
          %vm739 = vcmp.eq.f32.partialorder %v723, inf
          %v740 = vsel %vm739, %v723, %v738
          %vm741 = vcmp.eq.f32.partialorder %v723, 0.0
          %v742 = vand.u32 %v723, 2147483648
          %v743 = vsel %vm741, %v742, %v740
          %v744 = vrsqrt.pop %v724
          %v745 = vmul.f32 %v724, %v744
          %vm746 = vcmp.eq.f32.partialorder %v724, inf
          %v747 = vsel %vm746, %v724, %v745
          %vm748 = vcmp.eq.f32.partialorder %v724, 0.0
          %v749 = vand.u32 %v724, 2147483648
          %v750 = vsel %vm748, %v749, %v747
          %v751 = vrsqrt.pop %v725
          %v752 = vmul.f32 %v725, %v751
          %vm753 = vcmp.eq.f32.partialorder %v725, inf
          %v754 = vsel %vm753, %v725, %v752
          %vm755 = vcmp.eq.f32.partialorder %v725, 0.0
          %v756 = vand.u32 %v725, 2147483648
          %v757 = vsel %vm755, %v756, %v754
          %v758 = vrsqrt.pop %v726
          %v759 = vmul.f32 %v726, %v758
          %vm760 = vcmp.eq.f32.partialorder %v726, inf
          %v761 = vsel %vm760, %v726, %v759
          %vm762 = vcmp.eq.f32.partialorder %v726, 0.0
          %v763 = vand.u32 %v726, 2147483648
          %v764 = vsel %vm762, %v763, %v761
          %v765 = vrsqrt.pop %v727
          %v766 = vmul.f32 %v727, %v765
          %vm767 = vcmp.eq.f32.partialorder %v727, inf
          %v768 = vsel %vm767, %v727, %v766
          %vm769 = vcmp.eq.f32.partialorder %v727, 0.0
          %v770 = vand.u32 %v727, 2147483648
          %v771 = vsel %vm769, %v770, %v768
          %v772 = vrsqrt.pop %v728
          %v773 = vmul.f32 %v728, %v772
          %vm774 = vcmp.eq.f32.partialorder %v728, inf
          %v775 = vsel %vm774, %v728, %v773
          %vm776 = vcmp.eq.f32.partialorder %v728, 0.0
          %v777 = vand.u32 %v728, 2147483648
          %v778 = vsel %vm776, %v777, %v775
          %v779 = vrsqrt.pop %v729
          %v780 = vmul.f32 %v729, %v779
          %vm781 = vcmp.eq.f32.partialorder %v729, inf
          %v782 = vsel %vm781, %v729, %v780
          %vm783 = vcmp.eq.f32.partialorder %v729, 0.0
          %v784 = vand.u32 %v729, 2147483648
          %v785 = vsel %vm783, %v784, %v782
          %v786 = vrsqrt.pop %v736
          %v787 = vmul.f32 %v736, %v786
          %vm788 = vcmp.eq.f32.partialorder %v736, inf
          %v789 = vsel %vm788, %v736, %v787
          %vm790 = vcmp.eq.f32.partialorder %v736, 0.0
          %v791 = vand.u32 %v736, 2147483648
          %v792 = vsel %vm790, %v791, %v789
          %v793 = vrsqrt.pop %v743
          %v794 = vmul.f32 %v743, %v793
          %vm795 = vcmp.eq.f32.partialorder %v743, inf
          %v796 = vsel %vm795, %v743, %v794
          %vm797 = vcmp.eq.f32.partialorder %v743, 0.0
          %v798 = vand.u32 %v743, 2147483648
          %v799 = vsel %vm797, %v798, %v796
          %v800 = vrsqrt.pop %v750
          %v801 = vmul.f32 %v750, %v800
          %vm802 = vcmp.eq.f32.partialorder %v750, inf
          %v803 = vsel %vm802, %v750, %v801
          %vm804 = vcmp.eq.f32.partialorder %v750, 0.0
          %v805 = vand.u32 %v750, 2147483648
          %v806 = vsel %vm804, %v805, %v803
          %v807 = vrsqrt.pop %v757
          %v808 = vmul.f32 %v757, %v807
          %vm809 = vcmp.eq.f32.partialorder %v757, inf
          %v810 = vsel %vm809, %v757, %v808
          %vm811 = vcmp.eq.f32.partialorder %v757, 0.0
          %v812 = vand.u32 %v757, 2147483648
          %v813 = vsel %vm811, %v812, %v810
          %v814 = vrsqrt.pop %v764
          %v815 = vmul.f32 %v764, %v814
          %vm816 = vcmp.eq.f32.partialorder %v764, inf
          %v817 = vsel %vm816, %v764, %v815
          %vm818 = vcmp.eq.f32.partialorder %v764, 0.0
          %v819 = vand.u32 %v764, 2147483648
          %v820 = vsel %vm818, %v819, %v817
          %v821 = vrsqrt.pop %v771
          %v822 = vmul.f32 %v771, %v821
          %vm823 = vcmp.eq.f32.partialorder %v771, inf
          %v824 = vsel %vm823, %v771, %v822
          %vm825 = vcmp.eq.f32.partialorder %v771, 0.0
          %v826 = vand.u32 %v771, 2147483648
          %v827 = vsel %vm825, %v826, %v824
          %v828 = vrsqrt.pop %v778
          %v829 = vmul.f32 %v778, %v828
          %vm830 = vcmp.eq.f32.partialorder %v778, inf
          %v831 = vsel %vm830, %v778, %v829
          %vm832 = vcmp.eq.f32.partialorder %v778, 0.0
          %v833 = vand.u32 %v778, 2147483648
          %v834 = vsel %vm832, %v833, %v831
          %v835 = vrsqrt.pop %v785
          %v836 = vmul.f32 %v785, %v835
          %vm837 = vcmp.eq.f32.partialorder %v785, inf
          %v838 = vsel %vm837, %v785, %v836
          %vm839 = vcmp.eq.f32.partialorder %v785, 0.0
          %v840 = vand.u32 %v785, 2147483648
          %v841 = vsel %vm839, %v840, %v838
          %v842 = vsel %vm437, %v792, 0.0
          %v843 = vsel %vm437, %v799, 0.0
          %v844 = vadd.f32 %v842, %v843
          %v845 = vsel %vm437, %v806, 0.0
          %v846 = vadd.f32 %v844, %v845
          %v847 = vsel %vm437, %v813, 0.0
          %v848 = vadd.f32 %v846, %v847
          %v849 = vsel %vm437, %v820, 0.0
          %v850 = vadd.f32 %v848, %v849
          %v851 = vsel %vm437, %v827, 0.0
          %v852 = vadd.f32 %v850, %v851
          %v853 = vsel %vm437, %v834, 0.0
          %v854 = vadd.f32 %v852, %v853
          %v855 = vsel %vm437, %v841, 0.0
          %v856 = vadd.f32 %v854, %v855
          %857 = vadd.xlane.f32.xlu0 %v856
          %v858 = vpop.xlane.xlu0 %857
          %v859 = vrot.slane %v858, 4
          %v860 = vadd.f32 %v858, %v859
          %v861 = vrot.slane %v860, 2
          %v862 = vadd.f32 %v860, %v861
          %v863 = vrot.slane %v862, 1
          %v864 = vadd.f32 %v862, %v863
          %s865 = vtos %v864
          %v866 = vmul.f32 %v706, %v706
          %v867 = vmul.f32 %v707, %v707
          %v868 = vmul.f32 %v708, %v708
          %v869 = vmul.f32 %v709, %v709
          %v870 = vmul.f32 %v710, %v710
          %v871 = vmul.f32 %v711, %v711
          %v872 = vmul.f32 %v712, %v712
          %v873 = vmul.f32 %v713, %v713
          %v874 = vadd.f32 %v866, 1e-18
          %v875 = vadd.f32 %v867, 1e-18
          %v876 = vadd.f32 %v868, 1e-18
          %v877 = vadd.f32 %v869, 1e-18
          %v878 = vadd.f32 %v870, 1e-18
          %v879 = vadd.f32 %v871, 1e-18
          %v880 = vadd.f32 %v872, 1e-18
          %v881 = vadd.f32 %v873, 1e-18
          %v882 = vrsqrt.pop %v874
          %v883 = vmul.f32 %v874, %v882
          %vm884 = vcmp.eq.f32.partialorder %v874, inf
          %v885 = vsel %vm884, %v874, %v883
          %vm886 = vcmp.eq.f32.partialorder %v874, 0.0
          %v887 = vand.u32 %v874, 2147483648
          %v888 = vsel %vm886, %v887, %v885
          %v889 = vrsqrt.pop %v875
          %v890 = vmul.f32 %v875, %v889
          %vm891 = vcmp.eq.f32.partialorder %v875, inf
          %v892 = vsel %vm891, %v875, %v890
          %vm893 = vcmp.eq.f32.partialorder %v875, 0.0
          %v894 = vand.u32 %v875, 2147483648
          %v895 = vsel %vm893, %v894, %v892
          %v896 = vrsqrt.pop %v876
          %v897 = vmul.f32 %v876, %v896
          %vm898 = vcmp.eq.f32.partialorder %v876, inf
          %v899 = vsel %vm898, %v876, %v897
          %vm900 = vcmp.eq.f32.partialorder %v876, 0.0
          %v901 = vand.u32 %v876, 2147483648
          %v902 = vsel %vm900, %v901, %v899
          %v903 = vrsqrt.pop %v877
          %v904 = vmul.f32 %v877, %v903
          %vm905 = vcmp.eq.f32.partialorder %v877, inf
          %v906 = vsel %vm905, %v877, %v904
          %vm907 = vcmp.eq.f32.partialorder %v877, 0.0
          %v908 = vand.u32 %v877, 2147483648
          %v909 = vsel %vm907, %v908, %v906
          %v910 = vrsqrt.pop %v878
          %v911 = vmul.f32 %v878, %v910
          %vm912 = vcmp.eq.f32.partialorder %v878, inf
          %v913 = vsel %vm912, %v878, %v911
          %vm914 = vcmp.eq.f32.partialorder %v878, 0.0
          %v915 = vand.u32 %v878, 2147483648
          %v916 = vsel %vm914, %v915, %v913
          %v917 = vrsqrt.pop %v879
          %v918 = vmul.f32 %v879, %v917
          %vm919 = vcmp.eq.f32.partialorder %v879, inf
          %v920 = vsel %vm919, %v879, %v918
          %vm921 = vcmp.eq.f32.partialorder %v879, 0.0
          %v922 = vand.u32 %v879, 2147483648
          %v923 = vsel %vm921, %v922, %v920
          %v924 = vrsqrt.pop %v880
          %v925 = vmul.f32 %v880, %v924
          %vm926 = vcmp.eq.f32.partialorder %v880, inf
          %v927 = vsel %vm926, %v880, %v925
          %vm928 = vcmp.eq.f32.partialorder %v880, 0.0
          %v929 = vand.u32 %v880, 2147483648
          %v930 = vsel %vm928, %v929, %v927
          %v931 = vrsqrt.pop %v881
          %v932 = vmul.f32 %v881, %v931
          %vm933 = vcmp.eq.f32.partialorder %v881, inf
          %v934 = vsel %vm933, %v881, %v932
          %vm935 = vcmp.eq.f32.partialorder %v881, 0.0
          %v936 = vand.u32 %v881, 2147483648
          %v937 = vsel %vm935, %v936, %v934
          %v938 = vrsqrt.pop %v888
          %v939 = vmul.f32 %v888, %v938
          %vm940 = vcmp.eq.f32.partialorder %v888, inf
          %v941 = vsel %vm940, %v888, %v939
          %vm942 = vcmp.eq.f32.partialorder %v888, 0.0
          %v943 = vand.u32 %v888, 2147483648
          %v944 = vsel %vm942, %v943, %v941
          %v945 = vrsqrt.pop %v895
          %v946 = vmul.f32 %v895, %v945
          %vm947 = vcmp.eq.f32.partialorder %v895, inf
          %v948 = vsel %vm947, %v895, %v946
          %vm949 = vcmp.eq.f32.partialorder %v895, 0.0
          %v950 = vand.u32 %v895, 2147483648
          %v951 = vsel %vm949, %v950, %v948
          %v952 = vrsqrt.pop %v902
          %v953 = vmul.f32 %v902, %v952
          %vm954 = vcmp.eq.f32.partialorder %v902, inf
          %v955 = vsel %vm954, %v902, %v953
          %vm956 = vcmp.eq.f32.partialorder %v902, 0.0
          %v957 = vand.u32 %v902, 2147483648
          %v958 = vsel %vm956, %v957, %v955
          %v959 = vrsqrt.pop %v909
          %v960 = vmul.f32 %v909, %v959
          %vm961 = vcmp.eq.f32.partialorder %v909, inf
          %v962 = vsel %vm961, %v909, %v960
          %vm963 = vcmp.eq.f32.partialorder %v909, 0.0
          %v964 = vand.u32 %v909, 2147483648
          %v965 = vsel %vm963, %v964, %v962
          %v966 = vrsqrt.pop %v916
          %v967 = vmul.f32 %v916, %v966
          %vm968 = vcmp.eq.f32.partialorder %v916, inf
          %v969 = vsel %vm968, %v916, %v967
          %vm970 = vcmp.eq.f32.partialorder %v916, 0.0
          %v971 = vand.u32 %v916, 2147483648
          %v972 = vsel %vm970, %v971, %v969
          %v973 = vrsqrt.pop %v923
          %v974 = vmul.f32 %v923, %v973
          %vm975 = vcmp.eq.f32.partialorder %v923, inf
          %v976 = vsel %vm975, %v923, %v974
          %vm977 = vcmp.eq.f32.partialorder %v923, 0.0
          %v978 = vand.u32 %v923, 2147483648
          %v979 = vsel %vm977, %v978, %v976
          %v980 = vrsqrt.pop %v930
          %v981 = vmul.f32 %v930, %v980
          %vm982 = vcmp.eq.f32.partialorder %v930, inf
          %v983 = vsel %vm982, %v930, %v981
          %vm984 = vcmp.eq.f32.partialorder %v930, 0.0
          %v985 = vand.u32 %v930, 2147483648
          %v986 = vsel %vm984, %v985, %v983
          %v987 = vrsqrt.pop %v937
          %v988 = vmul.f32 %v937, %v987
          %vm989 = vcmp.eq.f32.partialorder %v937, inf
          %v990 = vsel %vm989, %v937, %v988
          %vm991 = vcmp.eq.f32.partialorder %v937, 0.0
          %v992 = vand.u32 %v937, 2147483648
          %v993 = vsel %vm991, %v992, %v990
          %v994 = vsel %vm437, %v944, 0.0
          %v995 = vsel %vm437, %v951, 0.0
          %v996 = vadd.f32 %v994, %v995
          %v997 = vsel %vm437, %v958, 0.0
          %v998 = vadd.f32 %v996, %v997
          %v999 = vsel %vm437, %v965, 0.0
          %v1000 = vadd.f32 %v998, %v999
          %v1001 = vsel %vm437, %v972, 0.0
          %v1002 = vadd.f32 %v1000, %v1001
          %v1003 = vsel %vm437, %v979, 0.0
          %v1004 = vadd.f32 %v1002, %v1003
          %v1005 = vsel %vm437, %v986, 0.0
          %v1006 = vadd.f32 %v1004, %v1005
          %v1007 = vsel %vm437, %v993, 0.0
          %v1008 = vadd.f32 %v1006, %v1007
          %1009 = vadd.xlane.f32.xlu0 %v1008
          %v1010 = vpop.xlane.xlu0 %1009
          %v1011 = vrot.slane %v1010, 4
          %v1012 = vadd.f32 %v1010, %v1011
          %v1013 = vrot.slane %v1012, 2
          %v1014 = vadd.f32 %v1012, %v1013
          %v1015 = vrot.slane %v1014, 1
          %v1016 = vadd.f32 %v1014, %v1015
          %s1017 = vtos %v1016
          %s1018 = sadd.f32 %s865, %s1017
          %v1019 = vrcp.pop 1024.0
          %s1020 = vtos %v1019
          %s1021 = smul.f32 %s1018, %s1020
          %v1022 = vld [vmem:[%s4] sm:$0x1]
          %v1023 = vld [vmem:[%s5] sm:$0x1]
          %v1024 = vand.u32 2147483647, %v1022
          %v1025 = vsub.f32 0.0, %v1024
          %v1026 = vmul.f32 %v1025, 1.442695
          %v1027 = vpow.pop %v1026
          %vm1028 = vcmp.lt.f32.partialorder %v1027, 1e-05
          %v1029 = vadd.f32 %v1027, 1.0
          %v1030 = vlog2.pop %v1029
          %v1031 = vmul.f32 %v1030, 0.6931472
          %v1032 = vsel %vm1028, %v1027, %v1031
          %v1033 = vmax.f32 %v1022, 0.0
          %v1034 = vmul.f32 %v1022, %v1023
          %v1035 = vsub.f32 %v1033, %v1034
          %v1036 = vadd.f32 %v1035, %v1032
          %vm1037 = vcmask 106496
          %v1038 = vsel %vm1037, %v1036, 0.0
          %1039 = vadd.xlane.f32.xlu0 %v1038
          %v1040 = vpop.xlane.xlu0 %1039
          %v1041 = vrot.slane %v1040, 4
          %v1042 = vadd.f32 %v1040, %v1041
          %v1043 = vrot.slane %v1042, 2
          %v1044 = vadd.f32 %v1042, %v1043
          %v1045 = vrot.slane %v1044, 1
          %v1046 = vadd.f32 %v1044, %v1045
          %s1047 = vtos %v1046
          %v1048 = vrcp.pop 14.0
          %s1049 = vtos %v1048
          %s1050 = smul.f32 %s1047, %s1049
          %s1051 = smul.f32 %s1021, 0.1
          %s1052 = sadd.f32 %s1051, %s1050
          %v1053 = vstv %s1052
          %v1054 = vadd.f32 %v1053, 0.0
          %vm1055 = vcmask 0
          %1056 = vst.msk [vmem:[#allocation8] sm:$0x1] %vm1055, %v1054
        $region76: #{tpu_custom_call.1} parent=59 // pred_fallthru
          _
        %v1057 = vld [vmem:[%s414] sm:$0xff]
        %v1058 = vld [vmem:[%s414 + $0x8] sm:$0xff]
        %v1059 = vld [vmem:[%s365] sm:$0xff]
        %v1060 = vld [vmem:[%s365 + $0x8] sm:$0xff]
        %v1061 = vsub.f32 %v1059, %v1057
        %v1062 = vsub.f32 %v1060, %v1058
        %v1063 = vmul.f32 %v1061, %v1061
        %v1064 = vmul.f32 %v1062, %v1062
        %v1065 = vadd.f32 %v1063, 1e-18
        %v1066 = vadd.f32 %v1064, 1e-18
        %v1067 = vrsqrt.pop %v1065
        %v1068 = vmul.f32 %v1065, %v1067
        %vm1069 = vcmp.eq.f32.partialorder %v1065, inf
        %v1070 = vsel %vm1069, %v1065, %v1068
        %vm1071 = vcmp.eq.f32.partialorder %v1065, 0.0
        %v1072 = vand.u32 %v1065, 2147483648
        %v1073 = vsel %vm1071, %v1072, %v1070
        %v1074 = vrsqrt.pop %v1066
        %v1075 = vmul.f32 %v1066, %v1074
        %vm1076 = vcmp.eq.f32.partialorder %v1066, inf
        %v1077 = vsel %vm1076, %v1066, %v1075
        %vm1078 = vcmp.eq.f32.partialorder %v1066, 0.0
        %v1079 = vand.u32 %v1066, 2147483648
        %v1080 = vsel %vm1078, %v1079, %v1077
        %v1081 = vrsqrt.pop %v1073
        %v1082 = vmul.f32 %v1073, %v1081
        %vm1083 = vcmp.eq.f32.partialorder %v1073, inf
        %v1084 = vsel %vm1083, %v1073, %v1082
        %vm1085 = vcmp.eq.f32.partialorder %v1073, 0.0
        %v1086 = vand.u32 %v1073, 2147483648
        %v1087 = vsel %vm1085, %v1086, %v1084
        %v1088 = vrsqrt.pop %v1080
        %v1089 = vmul.f32 %v1080, %v1088
        %vm1090 = vcmp.eq.f32.partialorder %v1080, inf
        %v1091 = vsel %vm1090, %v1080, %v1089
        %vm1092 = vcmp.eq.f32.partialorder %v1080, 0.0
        %v1093 = vand.u32 %v1080, 2147483648
        %v1094 = vsel %vm1092, %v1093, %v1091
        %vm1095 = vcmask 130048
        %v1096 = vsel %vm1095, %v1087, 0.0
        %v1097 = vsel %vm1095, %v1094, 0.0
        %v1098 = vadd.f32 %v1096, %v1097
        %1099 = vadd.xlane.f32.xlu0 %v1098
        %v1100 = vpop.xlane.xlu0 %1099
        %v1101 = vrot.slane %v1100, 4
        %v1102 = vadd.f32 %v1100, %v1101
        %v1103 = vrot.slane %v1102, 2
        %v1104 = vadd.f32 %v1102, %v1103
        %v1105 = vrot.slane %v1104, 1
        %v1106 = vadd.f32 %v1104, %v1105
        %s1107 = vtos %v1106
        %v1108 = vmul.f32 %v1057, %v1057
        %v1109 = vmul.f32 %v1058, %v1058
        %v1110 = vmul.f32 %v1059, %v1059
        %v1111 = vmul.f32 %v1060, %v1060
        %v1112 = vmul.f32 %v1057, %v1059
        %v1113 = vmul.f32 %v1058, %v1060
        %v1114 = vld [vmem:[#allocation5] sm:$0xff]
        %v1115 = vld [vmem:[#allocation5 + $0x8] sm:$0xff]
        %v1117 = vsel %vm1095, %v1057, 0
        %v1120 = vsel %vm1095, %v1058, 0
        %v1123 = vsel %vm1095, %v1059, 0
        %v1126 = vsel %vm1095, %v1060, 0
        %v1129 = vsel %vm1095, %v1108, 0
        %v1132 = vsel %vm1095, %v1109, 0
        %v1135 = vsel %vm1095, %v1110, 0
        %v1138 = vsel %vm1095, %v1111, 0
        %v1141 = vsel %vm1095, %v1112, 0
        %v1144 = vsel %vm1095, %v1113, 0
        %1146 = vmatprep.subr.mxu0 0.0
        %1147 = vmatpush1.msra.mxu0 %v1114
        %1148 = vmatprep.subr.mxu0 0.0
        %1149 = vmatpush1.msra.mxu0 %v1115
        %1150 = vmatprep.subr.mxu0 0.0
        %1151 = vmatpush1.msra.mxu0 0.0
        %1152 = vmatprep.subr.mxu0 0.0
        %1153 = vmatpush1.msra.mxu0 0.0
        %1154 = vmatprep.subr.mxu0 0.0
        %1155 = vmatpush1.msra.mxu0 0.0
        %1156 = vmatprep.subr.mxu0 0.0
        %1157 = vmatpush1.msra.mxu0 0.0
        %1158 = vmatprep.subr.mxu0 0.0
        %1159 = vmatpush1.msra.mxu0 0.0
        %1160 = vmatprep.subr.mxu0 0.0
        %1161 = vmatpush1.msra.mxu0 0.0
        %1162 = vmatprep.subr.mxu0 0.0
        %1163 = vmatpush1.msra.mxu0 0.0
        %1164 = vmatprep.subr.mxu0 0.0
        %1165 = vmatpush1.msra.mxu0 0.0
        %1166 = vmatprep.subr.mxu0 0.0
        %1167 = vmatpush1.msra.mxu0 0.0
        %1168 = vmatprep.subr.mxu0 0.0
        %1169 = vmatpush1.msra.mxu0 0.0
        %1170 = vmatprep.subr.mxu0 0.0
        %1171 = vmatpush1.msra.mxu0 0.0
        %1172 = vmatprep.subr.mxu0 0.0
        %1173 = vmatpush1.msra.mxu0 0.0
        %1174 = vmatprep.subr.mxu0 0.0
        %1175 = vmatpush1.msra.mxu0 0.0
        %1176 = vmatprep.subr.mxu0 0.0
        %1177 = vmatpush1.msra.mxu0 0.0
        %1178 = vmatprep.subr.mxu0 0.0
        %1179 = vmatpush1.msra.mxu0 0.0
        %1180 = vmatprep.subr.mxu0 0.0
        %1181 = vmatpush1.msra.mxu0 0.0
        %1182 = vmatprep.subr.mxu0 0.0
        %1183 = vmatpush1.msra.mxu0 0.0
        %1184 = vmatprep.subr.mxu0 0.0
        %1185 = vmatpush1.msra.mxu0 0.0
        %1186 = vmatprep.subr.mxu0 0.0
        %1187 = vmatpush1.msra.mxu0 0.0
        %1188 = vmatprep.subr.mxu0 0.0
        %1189 = vmatpush1.msra.mxu0 0.0
        %1190 = vmatprep.subr.mxu0 0.0
        %1191 = vmatpush1.msra.mxu0 0.0
        %1192 = vmatprep.subr.mxu0 0.0
        %1193 = vmatpush1.msra.mxu0 0.0
        %1194 = vmatprep.subr.mxu0 0.0
        %1195 = vmatpush1.msra.mxu0 0.0
        %1196 = vmatprep.subr.mxu0 0.0
        %1197 = vmatpush1.msra.mxu0 0.0
        %1198 = vmatprep.subr.mxu0 0.0
        %1199 = vmatpush1.msra.mxu0 0.0
        %1200 = vmatprep.subr.mxu0 0.0
        %1201 = vmatpush1.msra.mxu0 0.0
        %1202 = vmatprep.subr.mxu0 0.0
        %1203 = vmatpush1.msra.mxu0 0.0
        %1204 = vmatprep.subr.mxu0 0.0
        %1205 = vmatpush1.msra.mxu0 0.0
        %1206 = vmatprep.subr.mxu0 0.0
        %1207 = vmatpush1.msra.mxu0 0.0
        %1208 = vmatprep.subr.mxu0 0.0
        %1209 = vmatpush1.msra.mxu0 0.0
        %1210 = vmatprep.mubr.f32.mxu0 0.0
        %1211 = vmatmul.mubr.f32.gmra.mrb[0].mxu0 %v1117
        %v1212 = vpop.f32.mrb[0].mxu0
        %v1213 = vadd.f32 0.0, %v1212
        %v1214 = vpop.f32.mrb[0].mxu0
        %1215 = vmatprep.mubr.f32.mxu0 0.0
        %1216 = vmatmul.mubr.f32.gmra.mrb[0].mxu0 %v1120
        %v1217 = vpop.f32.mrb[0].mxu0
        %v1218 = vadd.f32 0.0, %v1217
        %v1219 = vpop.f32.mrb[0].mxu0
        %1220 = vmatprep.mubr.f32.mxu0 0.0
        %1221 = vmatmul.mubr.f32.gmra.mrb[0].mxu0 %v1123
        %v1222 = vpop.f32.mrb[0].mxu0
        %v1223 = vadd.f32 0.0, %v1222
        %v1224 = vpop.f32.mrb[0].mxu0
        %1225 = vmatprep.mubr.f32.mxu0 0.0
        %1226 = vmatmul.mubr.f32.gmra.mrb[0].mxu0 %v1126
        %v1227 = vpop.f32.mrb[0].mxu0
        %v1228 = vadd.f32 0.0, %v1227
        %v1229 = vpop.f32.mrb[0].mxu0
        %1230 = vmatprep.mubr.f32.mxu0 0.0
        %1231 = vmatmul.mubr.f32.gmra.mrb[0].mxu0 %v1129
        %v1232 = vpop.f32.mrb[0].mxu0
        %v1233 = vadd.f32 0.0, %v1232
        %v1234 = vpop.f32.mrb[0].mxu0
        %1235 = vmatprep.mubr.f32.mxu0 0.0
        %1236 = vmatmul.mubr.f32.gmra.mrb[0].mxu0 %v1132
        %v1237 = vpop.f32.mrb[0].mxu0
        %v1238 = vadd.f32 0.0, %v1237
        %v1239 = vpop.f32.mrb[0].mxu0
        %1240 = vmatprep.mubr.f32.mxu0 0.0
        %1241 = vmatmul.mubr.f32.gmra.mrb[0].mxu0 %v1135
        %v1242 = vpop.f32.mrb[0].mxu0
        %v1243 = vadd.f32 0.0, %v1242
        %v1244 = vpop.f32.mrb[0].mxu0
        %1245 = vmatprep.mubr.f32.mxu0 0.0
        %1246 = vmatmul.mubr.f32.gmra.mrb[0].mxu0 %v1138
        %v1247 = vpop.f32.mrb[0].mxu0
        %v1248 = vadd.f32 0.0, %v1247
        %v1249 = vpop.f32.mrb[0].mxu0
        %1250 = vmatprep.mubr.f32.mxu0 0.0
        %1251 = vmatmul.mubr.f32.gmra.mrb[0].mxu0 %v1141
        %v1252 = vpop.f32.mrb[0].mxu0
        %v1253 = vadd.f32 0.0, %v1252
        %v1254 = vpop.f32.mrb[0].mxu0
        %1255 = vmatprep.mubr.f32.mxu0 0.0
        %1256 = vmatmul.mubr.f32.gmra.mrb[0].mxu0 %v1144
        %v1257 = vpop.f32.mrb[0].mxu0
        %v1258 = vadd.f32 0.0, %v1257
        %v1259 = vpop.f32.mrb[0].mxu0
        %1260 = vdwg.mxu0
        %v1261 = vld [vmem:[%s7] sm:$0xff]
        %v1262 = vld [vmem:[%s7 + $0x8] sm:$0xff]
        %v1263 = vld [vmem:[%s7 + $0x10] sm:$0xff]
        %v1264 = vld [vmem:[%s7 + $0x18] sm:$0xff]
        %v1265 = vld [vmem:[%s7 + $0x20] sm:$0xff]
        %v1266 = vld [vmem:[%s7 + $0x28] sm:$0xff]
        %v1267 = vld [vmem:[%s7 + $0x30] sm:$0xff]
        %v1268 = vld [vmem:[%s7 + $0x38] sm:$0xff]
        %v1269 = vld [vmem:[%s7 + $0x40] sm:$0xff]
        %v1270 = vld [vmem:[%s7 + $0x48] sm:$0xff]
        %vm1271 = vcmask 654336
        %v1273 = vsel %vm1271, %v1261, 0
        %v1276 = vsel %vm1271, %v1262, 0
        %v1279 = vsel %vm1271, %v1263, 0
        %v1282 = vsel %vm1271, %v1264, 0
        %v1285 = vsel %vm1271, %v1265, 0
        %v1288 = vsel %vm1271, %v1266, 0
        %v1291 = vsel %vm1271, %v1267, 0
        %v1294 = vsel %vm1271, %v1268, 0
        %v1297 = vsel %vm1271, %v1269, 0
        %v1300 = vsel %vm1271, %v1270, 0
        %1302 = vmatprep.subr.mxu0 0.0
        %1303 = vmatpush1.msra.mxu0 %v1213
        %1304 = vmatprep.subr.mxu0 0.0
        %1305 = vmatpush1.msra.mxu0 %v1218
        %1306 = vmatprep.subr.mxu0 0.0
        %1307 = vmatpush1.msra.mxu0 %v1223
        %1308 = vmatprep.subr.mxu0 0.0
        %1309 = vmatpush1.msra.mxu0 %v1228
        %1310 = vmatprep.subr.mxu0 0.0
        %1311 = vmatpush1.msra.mxu0 %v1233
        %1312 = vmatprep.subr.mxu0 0.0
        %1313 = vmatpush1.msra.mxu0 %v1238
        %1314 = vmatprep.subr.mxu0 0.0
        %1315 = vmatpush1.msra.mxu0 %v1243
        %1316 = vmatprep.subr.mxu0 0.0
        %1317 = vmatpush1.msra.mxu0 %v1248
        %1318 = vmatprep.subr.mxu0 0.0
        %1319 = vmatpush1.msra.mxu0 %v1253
        %1320 = vmatprep.subr.mxu0 0.0
        %1321 = vmatpush1.msra.mxu0 %v1258
        %1322 = vmatprep.subr.mxu0 0.0
        %1323 = vmatpush1.msra.mxu0 0.0
        %1324 = vmatprep.subr.mxu0 0.0
        %1325 = vmatpush1.msra.mxu0 0.0
        %1326 = vmatprep.subr.mxu0 0.0
        %1327 = vmatpush1.msra.mxu0 0.0
        %1328 = vmatprep.subr.mxu0 0.0
        %1329 = vmatpush1.msra.mxu0 0.0
        %1330 = vmatprep.subr.mxu0 0.0
        %1331 = vmatpush1.msra.mxu0 0.0
        %1332 = vmatprep.subr.mxu0 0.0
        %1333 = vmatpush1.msra.mxu0 0.0
        %1334 = vmatprep.subr.mxu0 0.0
        %1335 = vmatpush1.msra.mxu0 0.0
        %1336 = vmatprep.subr.mxu0 0.0
        %1337 = vmatpush1.msra.mxu0 0.0
        %1338 = vmatprep.subr.mxu0 0.0
        %1339 = vmatpush1.msra.mxu0 0.0
        %1340 = vmatprep.subr.mxu0 0.0
        %1341 = vmatpush1.msra.mxu0 0.0
        %1342 = vmatprep.subr.mxu0 0.0
        %1343 = vmatpush1.msra.mxu0 0.0
        %1344 = vmatprep.subr.mxu0 0.0
        %1345 = vmatpush1.msra.mxu0 0.0
        %1346 = vmatprep.subr.mxu0 0.0
        %1347 = vmatpush1.msra.mxu0 0.0
        %1348 = vmatprep.subr.mxu0 0.0
        %1349 = vmatpush1.msra.mxu0 0.0
        %1350 = vmatprep.subr.mxu0 0.0
        %1351 = vmatpush1.msra.mxu0 0.0
        %1352 = vmatprep.subr.mxu0 0.0
        %1353 = vmatpush1.msra.mxu0 0.0
        %1354 = vmatprep.subr.mxu0 0.0
        %1355 = vmatpush1.msra.mxu0 0.0
        %1356 = vmatprep.subr.mxu0 0.0
        %1357 = vmatpush1.msra.mxu0 0.0
        %1358 = vmatprep.subr.mxu0 0.0
        %1359 = vmatpush1.msra.mxu0 0.0
        %1360 = vmatprep.subr.mxu0 0.0
        %1361 = vmatpush1.msra.mxu0 0.0
        %1362 = vmatprep.subr.mxu0 0.0
        %1363 = vmatpush1.msra.mxu0 0.0
        %1364 = vmatprep.subr.mxu0 0.0
        %1365 = vmatpush1.msra.mxu0 0.0
        %1366 = vmatprep.mubr.f32.mxu0 0.0
        %1367 = vmatmul.mubr.f32.gmra.mrb[0].mxu0 %v1273
        %v1368 = vpop.f32.mrb[0].mxu0
        %v1369 = vadd.f32 0.0, %v1368
        %v1370 = vpop.f32.mrb[0].mxu0
        %1371 = vmatprep.mubr.f32.mxu0 0.0
        %1372 = vmatmul.mubr.f32.gmra.mrb[0].mxu0 %v1276
        %v1373 = vpop.f32.mrb[0].mxu0
        %v1374 = vadd.f32 0.0, %v1373
        %v1375 = vpop.f32.mrb[0].mxu0
        %1376 = vmatprep.mubr.f32.mxu0 0.0
        %1377 = vmatmul.mubr.f32.gmra.mrb[0].mxu0 %v1279
        %v1378 = vpop.f32.mrb[0].mxu0
        %v1379 = vadd.f32 0.0, %v1378
        %v1380 = vpop.f32.mrb[0].mxu0
        %1381 = vmatprep.mubr.f32.mxu0 0.0
        %1382 = vmatmul.mubr.f32.gmra.mrb[0].mxu0 %v1282
        %v1383 = vpop.f32.mrb[0].mxu0
        %v1384 = vadd.f32 0.0, %v1383
        %v1385 = vpop.f32.mrb[0].mxu0
        %1386 = vmatprep.mubr.f32.mxu0 0.0
        %1387 = vmatmul.mubr.f32.gmra.mrb[0].mxu0 %v1285
        %v1388 = vpop.f32.mrb[0].mxu0
        %v1389 = vadd.f32 0.0, %v1388
        %v1390 = vpop.f32.mrb[0].mxu0
        %1391 = vmatprep.mubr.f32.mxu0 0.0
        %1392 = vmatmul.mubr.f32.gmra.mrb[0].mxu0 %v1288
        %v1393 = vpop.f32.mrb[0].mxu0
        %v1394 = vadd.f32 0.0, %v1393
        %v1395 = vpop.f32.mrb[0].mxu0
        %1396 = vmatprep.mubr.f32.mxu0 0.0
        %1397 = vmatmul.mubr.f32.gmra.mrb[0].mxu0 %v1291
        %v1398 = vpop.f32.mrb[0].mxu0
        %v1399 = vadd.f32 0.0, %v1398
        %v1400 = vpop.f32.mrb[0].mxu0
        %1401 = vmatprep.mubr.f32.mxu0 0.0
        %1402 = vmatmul.mubr.f32.gmra.mrb[0].mxu0 %v1294
        %v1403 = vpop.f32.mrb[0].mxu0
        %v1404 = vadd.f32 0.0, %v1403
        %v1405 = vpop.f32.mrb[0].mxu0
        %1406 = vmatprep.mubr.f32.mxu0 0.0
        %1407 = vmatmul.mubr.f32.gmra.mrb[0].mxu0 %v1297
        %v1408 = vpop.f32.mrb[0].mxu0
        %v1409 = vadd.f32 0.0, %v1408
        %v1410 = vpop.f32.mrb[0].mxu0
        %1411 = vmatprep.mubr.f32.mxu0 0.0
        %1412 = vmatmul.mubr.f32.gmra.mrb[0].mxu0 %v1300
        %v1413 = vpop.f32.mrb[0].mxu0
        %v1414 = vadd.f32 0.0, %v1413
        %v1415 = vpop.f32.mrb[0].mxu0
        %1416 = vdwg.mxu0
        %v1417 = vmul.f32 %v1369, %v1369
        %v1418 = vmul.f32 %v1374, %v1374
        %v1419 = vmul.f32 %v1379, %v1379
        %v1420 = vmul.f32 %v1384, %v1384
        %v1421 = vmul.f32 %v1369, %v1379
        %v1422 = vmul.f32 %v1374, %v1384
        %v1423 = vsub.f32 %v1389, %v1417
        %v1424 = vsub.f32 %v1394, %v1418
        %v1425 = vsub.f32 %v1399, %v1419
        %v1426 = vsub.f32 %v1404, %v1420
        %v1427 = vsub.f32 %v1409, %v1421
        %v1428 = vsub.f32 %v1414, %v1422
        %v1429 = vmul.f32 %v1421, 2.0
        %v1430 = vmul.f32 %v1422, 2.0
        %v1431 = vadd.f32 %v1429, 0.0001
        %v1432 = vadd.f32 %v1430, 0.0001
        %v1433 = vmul.f32 %v1427, 2.0
        %v1434 = vmul.f32 %v1428, 2.0
        %v1435 = vadd.f32 %v1433, 0.0009
        %v1436 = vadd.f32 %v1434, 0.0009
        %v1437 = vmul.f32 %v1431, %v1435
        %v1438 = vmul.f32 %v1432, %v1436
        %v1439 = vadd.f32 %v1417, %v1419
        %v1440 = vadd.f32 %v1418, %v1420
        %v1441 = vadd.f32 %v1439, 0.0001
        %v1442 = vadd.f32 %v1440, 0.0001
        %v1443 = vadd.f32 %v1423, %v1425
        %v1444 = vadd.f32 %v1424, %v1426
        %v1445 = vadd.f32 %v1443, 0.0009
        %v1446 = vadd.f32 %v1444, 0.0009
        %v1447 = vmul.f32 %v1441, %v1445
        %v1448 = vmul.f32 %v1442, %v1446
        %v1449 = vrcp.pop %v1447
        %v1450 = vmul.f32 %v1437, %v1449
        %v1451 = vrcp.pop %v1448
        %v1452 = vmul.f32 %v1438, %v1451
        %v1453 = vsel %vm1095, %v1450, 0.0
        %v1454 = vsel %vm1095, %v1452, 0.0
        %v1455 = vadd.f32 %v1453, %v1454
        %1456 = vadd.xlane.f32.xlu0 %v1455
        %v1457 = vpop.xlane.xlu0 %1456
        %v1458 = vrot.slane %v1457, 4
        %v1459 = vadd.f32 %v1457, %v1458
        %v1460 = vrot.slane %v1459, 2
        %v1461 = vadd.f32 %v1459, %v1460
        %v1462 = vrot.slane %v1461, 1
        %v1463 = vadd.f32 %v1461, %v1462
        %s1464 = vtos %v1463
        %v1465 = vld [vmem:[#allocation8] sm:$0x1]
        %v1466 = vrcp.pop 1536.0
        %s1467 = vtos %v1466
        %s1468 = smul.f32 %s1107, %s1467
        %s1469 = smul.f32 %s1464, 0.5
        %v1470 = vrcp.pop 1536.0
        %s1471 = vtos %v1470
        %s1472 = smul.f32 %s1469, %s1471
        %s1473 = ssub.f32 %s1468, %s1472
        %v1474 = vstv %s1473
        %v1475 = vadd.f32 %v1465, %v1474
        %vm1476 = vcmask 0
        %1477 = vst.msk [vmem:[#allocation8] sm:$0x1] %vm1476, %v1475
        // Predicated region
        $region77: #{tpu_custom_call.1} parent=59 // pred_check
          %p1478 = pneg %p259
        $region78: #{tpu_custom_call.1} parent=59 // pred_check_branch
          %1480 = sbr.rel (%p1478) target = $region80
        $region79: #{tpu_custom_call.1} parent=59 // pred_region
          %s1482 = ssub.s32 16, 16
          %1483 = vsyncadd [#allocation4], %s1482
          %s1485 = sshll.u32 [#allocation8], 4
          %s1486 = int_to_ptr.vmem [resolvable:$true] %s1485
          %1488 = dma.vmem_to_hbm [thread:$0]  %s1486, 16, %s10, [#allocation4]
        $region80: #{tpu_custom_call.1} parent=59 // pred_fallthru
          _
        // Predicated region
        $region81: #{tpu_custom_call.1} parent=59 // pred_check
          %p1489 = pneg %p259
        $region82: #{tpu_custom_call.1} parent=59 // pred_check_branch
          %1491 = sbr.rel (%p1489) target = $region84
        $region83: #{tpu_custom_call.1} parent=59 // pred_region
          %1492 = dma.done [#allocation4], 16
        $region84: #{tpu_custom_call.1} parent=59 // pred_fallthru
          _
      $region60: #{tpu_custom_call.1} parent=5 // pred_fallthru
        _
      %p1493 = scmp.le.s32.totalorder 2, %s21
      // Predicated region
      $region85: #{tpu_custom_call.1} parent=5 // pred_check
        %p1494 = pneg %p1493
      $region86: #{tpu_custom_call.1} parent=5 // pred_check_branch
        %1496 = sbr.rel (%p1494) target = $region88
      $region87: #{tpu_custom_call.1} parent=5 // pred_region
        %s1497 = ssub.s32 %s21, 2
      $region88: #{tpu_custom_call.1} parent=5 // pred_fallthru
        _
    $region6: #{tpu_custom_call.1} parent=1 // loop_footer
      %s25 = sadd.s32 1, %s21
    $region7: #{tpu_custom_call.1} parent=1 // loop_footer_branch
      %20 = sbr.rel target = $region3
    $region8: #{tpu_custom_call.1} parent=1 // loop_exit
      _
    %1498 = vsyncpa [#allocation3], 1
    %s1499 = scalar_lea.sflag [#allocation3], 1
    %1500 = vsyncpa %s1499, 1
    %1501 = vsyncpa [#allocation6], 1
    %1502 = vsyncpa [#allocation4], 1
    %s1503 = scalar_lea.sflag [#allocation4], 1
    %1504 = vsyncpa %s1503, 1

</llo_original>
